<compile_context>
chip_gen: v6e
topology: v6e:2x2x1
jax: 0.10.0
libtpu: 0.0.40
codegen_flags: <defaults>
</compile_context>

<pallas_src>
import functools
import math

import jax
import jax.numpy as jnp
from jax import lax
from jax.experimental import pallas as pl
from jax.experimental.pallas import tpu as pltpu


def _attention_kernel(x_ref, wqkv_ref, bqkv_ref, wo3_ref, bo_ref, out_ref, *,
                      num_heads, head_size, matmul_dtype):
    # x_ref block (batch dim squeezed): (S, D), dtype == matmul_dtype.
    x = x_ref[...]
    S, D = x.shape
    H, hd = num_heads, head_size

    # --- fused QKV projection: one (S,D) x (D,3D) matmul, f32 accumulation ---
    qkv = jnp.dot(x, wqkv_ref[...],
                  preferred_element_type=jnp.float32) + bqkv_ref[...]   # (S, 3D)

    # --- head split, done once on the fused result ---
    # Static lane slices + stack (guaranteed-lowerable relayout); heads become
    # a leading batch dim so all contractions below stay batched.
    def split_heads(base):
        return jnp.stack(
            [qkv[:, base + h * hd: base + (h + 1) * hd] for h in range(H)],
            axis=0)                                                     # (H, S, hd)

    scale = jnp.float32(1.0 / math.sqrt(head_size))
    q_h = split_heads(0) * scale        # fold 1/sqrt(hd) into the small q tensor
    k_h = split_heads(D)
    v_h = split_heads(2 * D)

    # --- scores for all heads in one batched contraction (no K transpose) ---
    s = jnp.einsum("hqd,hkd->hqk",
                   q_h.astype(matmul_dtype), k_h.astype(matmul_dtype),
                   preferred_element_type=jnp.float32)                  # (H, S, S)

    # causal mask (matches torch's -10000 fill after scaling)
    row = lax.broadcasted_iota(jnp.int32, (S, S), 0)
    col = lax.broadcasted_iota(jnp.int32, (S, S), 1)
    causal = (col <= row)[None]                                         # (1, S, S)
    s = jnp.where(causal, s, jnp.float32(-10000.0))

    # --- softmax (f32 elementwise, reciprocal on the EUP) ---
    m = jnp.max(s, axis=-1, keepdims=True)
    e = jnp.exp(s - m)
    denom = jnp.sum(e, axis=-1, keepdims=True)
    p = e * pl.reciprocal(denom, approx=True)                           # (H, S, S)

    # --- context for all heads in one batched matmul ---
    ctx = jnp.einsum("hqk,hkd->hqd",
                     p.astype(matmul_dtype), v_h.astype(matmul_dtype),
                     preferred_element_type=jnp.float32)                # (H, S, hd)

    # --- output dense (Linear1D_Row) with the head merge folded into wo3:
    #     wo3[h, d, n] == wo[h*hd + d, n]  =>  out = sum_h ctx[h] @ wo3[h] ---
    out_h = jnp.einsum("hqd,hdn->hqn",
                       ctx.astype(matmul_dtype), wo3_ref[...],
                       preferred_element_type=jnp.float32)              # (H, S, D)
    out = jnp.sum(out_h, axis=0) + bo_ref[...]                          # (S, D)
    out_ref[...] = out.astype(out_ref.dtype)


def gpt_self_attention_1d(x, params, *, num_heads, matmul_dtype=None):
    """x: (B, S, D).  params: dict of weights (in,out) and biases (1,out).

    matmul_dtype: dtype for MXU operands (e.g. jnp.bfloat16 on v6e/v7x).
    Accumulation, biases, softmax and the output stay float32.
    """
    B, S, D = x.shape
    head_size = D // num_heads
    out_dtype = x.dtype
    mm_dtype = out_dtype if matmul_dtype is None else matmul_dtype

    x_in = x.astype(mm_dtype)
    # Fused QKV weight / bias (layout: [q | k | v] along the output axis).
    w_qkv = jnp.concatenate(
        [params["wq"], params["wk"], params["wv"]], axis=1).astype(mm_dtype)      # (D, 3D)
    b_qkv = jnp.concatenate(
        [params["bq"], params["bk"], params["bv"]], axis=1).astype(jnp.float32)   # (1, 3D)
    # Output-projection weight pre-reshaped (in the wrapper, for free) to
    # (H, hd, D) so the kernel never needs a concat/head-merge relayout.
    wo3 = params["wo"].reshape(num_heads, head_size, D).astype(mm_dtype)
    bo = params["bo"].astype(jnp.float32)

    x_spec = pl.BlockSpec((None, S, D), lambda b: (b, 0, 0))      # batch squeezed
    wqkv_spec = pl.BlockSpec((D, 3 * D), lambda b: (0, 0))
    bqkv_spec = pl.BlockSpec((1, 3 * D), lambda b: (0, 0))
    wo3_spec = pl.BlockSpec((num_heads, head_size, D), lambda b: (0, 0, 0))
    bo_spec = pl.BlockSpec((1, D), lambda b: (0, 0))
    out_spec = pl.BlockSpec((None, S, D), lambda b: (b, 0, 0))

    kernel = functools.partial(_attention_kernel, num_heads=num_heads,
                               head_size=head_size, matmul_dtype=mm_dtype)

    return pl.pallas_call(
        kernel,
        out_shape=jax.ShapeDtypeStruct((B, S, D), out_dtype),
        grid_spec=pltpu.PrefetchScalarGridSpec(
            num_scalar_prefetch=0,
            grid=(B,),
            in_specs=[x_spec, wqkv_spec, bqkv_spec, wo3_spec, bo_spec],
            out_specs=out_spec,
        ),
        compiler_params=pltpu.CompilerParams(
            dimension_semantics=("parallel",)),
    )(x_in, w_qkv, b_qkv, wo3, bo)


def _reference(x, params, num_heads):
    """Pure-JAX reference of the torch forward (attention_mask=None)."""
    B, S, D = x.shape
    hd = D // num_heads
    q = x @ params["wq"] + params["bq"]
    k = x @ params["wk"] + params["bk"]
    v = x @ params["wv"] + params["bv"]

    def split(t):
        return t.reshape(B, S, num_heads, hd).transpose(0, 2, 1, 3)

    q, k, v = split(q), split(k), split(v)
    s = jnp.einsum("bhqd,bhkd->bhqk", q, k) / math.sqrt(hd)
    causal = jnp.tril(jnp.ones((S, S), dtype=bool))[None, None]
    s = jnp.where(causal, s, jnp.float32(-10000.0))
    p = jax.nn.softmax(s, axis=-1)
    ctx = jnp.einsum("bhqk,bhkd->bhqd", p, v)
    ctx = ctx.transpose(0, 2, 1, 3).reshape(B, S, D)
    return ctx @ params["wo"] + params["bo"]


if __name__ == "__main__":
    # Small shapes consistent with the module: dim=32, num_heads=4, seq=8, batch=2
    B, S, D, H = 2, 8, 32, 4

    key = jax.random.PRNGKey(0)
    keys = jax.random.split(key, 9)

    params = {
        "wq": jax.random.normal(keys[0], (D, D), jnp.float32) * 0.05,
        "bq": jax.random.normal(keys[1], (1, D), jnp.float32) * 0.05,
        "wk": jax.random.normal(keys[2], (D, D), jnp.float32) * 0.05,
        "bk": jax.random.normal(keys[3], (1, D), jnp.float32) * 0.05,
        "wv": jax.random.normal(keys[4], (D, D), jnp.float32) * 0.05,
        "bv": jax.random.normal(keys[5], (1, D), jnp.float32) * 0.05,
        "wo": jax.random.normal(keys[6], (D, D), jnp.float32) * 0.05,
        "bo": jax.random.normal(keys[7], (1, D), jnp.float32) * 0.05,
    }
    x = jax.random.normal(keys[8], (B, S, D), jnp.float32)

    ref = _reference(x, params, H)

    # f32 matmul operands (default, matches the torch module's dtype=None).
    out = jax.block_until_ready(gpt_self_attention_1d(x, params, num_heads=H))
    assert out.shape == (B, S, D)
    assert jnp.allclose(out, ref, atol=2e-3, rtol=2e-3), "f32 mismatch vs reference"

    # bf16 matmul operands (v6e/v7x fast path), f32 accumulation: loose tolerance.
    out_bf16 = jax.block_until_ready(
        gpt_self_attention_1d(x, params, num_heads=H, matmul_dtype=jnp.bfloat16))
    assert out_bf16.shape == (B, S, D) and out_bf16.dtype == x.dtype
    assert jnp.allclose(out_bf16, ref, atol=5e-2, rtol=5e-2), "bf16 mismatch vs reference"

    print("KERNEL_OK")
</pallas_src>

<mosaic_0001>
module attributes {stable_mosaic.version = 11 : i64} {
  func.func @_attention_kernel(%arg0: i32, %arg1: memref<1x8x32xf32, #tpu.memory_space<vmem>>, %arg2: memref<32x96xf32, #tpu.memory_space<vmem>>, %arg3: memref<1x96xf32, #tpu.memory_space<vmem>>, %arg4: memref<4x8x32xf32, #tpu.memory_space<vmem>>, %arg5: memref<1x32xf32, #tpu.memory_space<vmem>>, %arg6: memref<1x8x32xf32, #tpu.memory_space<vmem>>) attributes {dimension_semantics = [#tpu.dimension_semantics<parallel>], iteration_bounds = array<i64: 2>, scalar_prefetch = 0 : i64, scratch_operands = 0 : i64, tpu.core_type = #tpu.core_type<tc>, window_params = [{transform_indices = @transform_0, window_bounds = array<i64: 1, 8, 32>}, {pipeline_mode = #tpu.pipeline_mode<synchronous>, transform_indices = @transform_1, window_bounds = array<i64: 32, 96>}, {pipeline_mode = #tpu.pipeline_mode<synchronous>, transform_indices = @transform_2, window_bounds = array<i64: 1, 96>}, {pipeline_mode = #tpu.pipeline_mode<synchronous>, transform_indices = @transform_3, window_bounds = array<i64: 4, 8, 32>}, {pipeline_mode = #tpu.pipeline_mode<synchronous>, transform_indices = @transform_4, window_bounds = array<i64: 1, 32>}, {transform_indices = @transform_5, window_bounds = array<i64: 1, 8, 32>}]} {
    %c0 = arith.constant 0 : index
    %c0_0 = arith.constant 0 : index
    %c0_1 = arith.constant 0 : index
    %0 = vector.load %arg1[%c0, %c0_0, %c0_1] : memref<1x8x32xf32, #tpu.memory_space<vmem>>, vector<1x8x32xf32>
    %1 = vector.shape_cast %0 : vector<1x8x32xf32> to vector<8x32xf32>
    %c0_2 = arith.constant 0 : index
    %c0_3 = arith.constant 0 : index
    %2 = vector.load %arg2[%c0_2, %c0_3] : memref<32x96xf32, #tpu.memory_space<vmem>>, vector<32x96xf32>
    %cst = arith.constant dense<0.000000e+00> : vector<8x96xf32>
    %3 = tpu.matmul %1, %2, %cst {dimension_numbers = #tpu.dot_dimension_numbers<[1], [0], [0], [1], [0, 0, 1, 1], [], []>} : vector<8x32xf32>, vector<32x96xf32>, vector<8x96xf32> -> vector<8x96xf32>
    %c0_4 = arith.constant 0 : index
    %c0_5 = arith.constant 0 : index
    %4 = vector.load %arg3[%c0_4, %c0_5] : memref<1x96xf32, #tpu.memory_space<vmem>>, vector<1x96xf32>
    %5 = vector.broadcast %4 : vector<1x96xf32> to vector<8x96xf32>
    %6 = arith.addf %3, %5 : vector<8x96xf32>
    %7 = vector.extract_strided_slice %6 {offsets = [0, 0], sizes = [8, 8], strides = [1, 1]} : vector<8x96xf32> to vector<8x8xf32>
    %8 = vector.extract_strided_slice %6 {offsets = [0, 8], sizes = [8, 8], strides = [1, 1]} : vector<8x96xf32> to vector<8x8xf32>
    %9 = vector.extract_strided_slice %6 {offsets = [0, 16], sizes = [8, 8], strides = [1, 1]} : vector<8x96xf32> to vector<8x8xf32>
    %10 = vector.extract_strided_slice %6 {offsets = [0, 24], sizes = [8, 8], strides = [1, 1]} : vector<8x96xf32> to vector<8x8xf32>
    %11 = vector.shape_cast %7 : vector<8x8xf32> to vector<1x8x8xf32>
    %12 = vector.shape_cast %8 : vector<8x8xf32> to vector<1x8x8xf32>
    %13 = vector.shape_cast %9 : vector<8x8xf32> to vector<1x8x8xf32>
    %14 = vector.shape_cast %10 : vector<8x8xf32> to vector<1x8x8xf32>
    %15 = tpu.concatenate %11, %12, %13, %14 in 0 : vector<1x8x8xf32>, vector<1x8x8xf32>, vector<1x8x8xf32>, vector<1x8x8xf32> -> vector<4x8x8xf32>
    %cst_6 = arith.constant 0.353553385 : f32
    %16 = vector.broadcast %cst_6 : f32 to vector<4x8x8xf32>
    %17 = arith.mulf %15, %16 : vector<4x8x8xf32>
    %18 = vector.extract_strided_slice %6 {offsets = [0, 32], sizes = [8, 8], strides = [1, 1]} : vector<8x96xf32> to vector<8x8xf32>
    %19 = vector.extract_strided_slice %6 {offsets = [0, 40], sizes = [8, 8], strides = [1, 1]} : vector<8x96xf32> to vector<8x8xf32>
    %20 = vector.extract_strided_slice %6 {offsets = [0, 48], sizes = [8, 8], strides = [1, 1]} : vector<8x96xf32> to vector<8x8xf32>
    %21 = vector.extract_strided_slice %6 {offsets = [0, 56], sizes = [8, 8], strides = [1, 1]} : vector<8x96xf32> to vector<8x8xf32>
    %22 = vector.shape_cast %18 : vector<8x8xf32> to vector<1x8x8xf32>
    %23 = vector.shape_cast %19 : vector<8x8xf32> to vector<1x8x8xf32>
    %24 = vector.shape_cast %20 : vector<8x8xf32> to vector<1x8x8xf32>
    %25 = vector.shape_cast %21 : vector<8x8xf32> to vector<1x8x8xf32>
    %26 = tpu.concatenate %22, %23, %24, %25 in 0 : vector<1x8x8xf32>, vector<1x8x8xf32>, vector<1x8x8xf32>, vector<1x8x8xf32> -> vector<4x8x8xf32>
    %27 = vector.extract_strided_slice %6 {offsets = [0, 64], sizes = [8, 8], strides = [1, 1]} : vector<8x96xf32> to vector<8x8xf32>
    %28 = vector.extract_strided_slice %6 {offsets = [0, 72], sizes = [8, 8], strides = [1, 1]} : vector<8x96xf32> to vector<8x8xf32>
    %29 = vector.extract_strided_slice %6 {offsets = [0, 80], sizes = [8, 8], strides = [1, 1]} : vector<8x96xf32> to vector<8x8xf32>
    %30 = vector.extract_strided_slice %6 {offsets = [0, 88], sizes = [8, 8], strides = [1, 1]} : vector<8x96xf32> to vector<8x8xf32>
    %31 = vector.shape_cast %27 : vector<8x8xf32> to vector<1x8x8xf32>
    %32 = vector.shape_cast %28 : vector<8x8xf32> to vector<1x8x8xf32>
    %33 = vector.shape_cast %29 : vector<8x8xf32> to vector<1x8x8xf32>
    %34 = vector.shape_cast %30 : vector<8x8xf32> to vector<1x8x8xf32>
    %35 = tpu.concatenate %31, %32, %33, %34 in 0 : vector<1x8x8xf32>, vector<1x8x8xf32>, vector<1x8x8xf32>, vector<1x8x8xf32> -> vector<4x8x8xf32>
    "tpu.trace_start"() <{level = 10 : i32, message = "hqd,hkd->hqk"}> : () -> ()
    %cst_7 = arith.constant dense<0.000000e+00> : vector<4x8x8xf32>
    %36 = tpu.matmul %17, %26, %cst_7 {dimension_numbers = #tpu.dot_dimension_numbers<[2], [2], [1], [1], [0, 0, 0, 1, 1, 1], [0], [0]>} : vector<4x8x8xf32>, vector<4x8x8xf32>, vector<4x8x8xf32> -> vector<4x8x8xf32>
    "tpu.trace_stop"() : () -> ()
    %37 = tpu.iota {dimensions = array<i32: 0>} : vector<8x8xi32>
    %38 = tpu.iota {dimensions = array<i32: 1>} : vector<8x8xi32>
    %39 = arith.cmpi sle, %38, %37 : vector<8x8xi32>
    %40 = vector.shape_cast %39 : vector<8x8xi1> to vector<1x8x8xi1>
    %cst_8 = arith.constant -1.000000e+04 : f32
    %41 = vector.shape_cast %40 : vector<1x8x8xi1> to vector<1x8x8xi1>
    %42 = vector.broadcast %41 : vector<1x8x8xi1> to vector<4x8x8xi1>
    %43 = vector.broadcast %cst_8 : f32 to vector<4x8x8xf32>
    %44 = arith.select %42, %36, %43 : vector<4x8x8xi1>, vector<4x8x8xf32>
    %cst_9 = arith.constant dense<0xFF800000> : vector<4x8xf32>
    %45 = vector.multi_reduction <maximumf>, %44, %cst_9 [2] : vector<4x8x8xf32> to vector<4x8xf32>
    %46 = vector.shape_cast %45 : vector<4x8xf32> to vector<4x8x1xf32>
    %47 = vector.broadcast %46 : vector<4x8x1xf32> to vector<4x8x8xf32>
    %48 = arith.subf %44, %47 : vector<4x8x8xf32>
    %49 = math.exp %48 : vector<4x8x8xf32>
    %cst_10 = arith.constant dense<0.000000e+00> : vector<4x8xf32>
    %50 = vector.multi_reduction <add>, %49, %cst_10 [2] : vector<4x8x8xf32> to vector<4x8xf32>
    %51 = vector.shape_cast %50 : vector<4x8xf32> to vector<4x8x1xf32>
    %52 = tpu.reciprocal %51 {approx = true} : vector<4x8x1xf32> -> vector<4x8x1xf32>
    %53 = vector.broadcast %52 : vector<4x8x1xf32> to vector<4x8x8xf32>
    %54 = arith.mulf %49, %53 : vector<4x8x8xf32>
    "tpu.trace_start"() <{level = 10 : i32, message = "hqk,hkd->hqd"}> : () -> ()
    %cst_11 = arith.constant dense<0.000000e+00> : vector<4x8x8xf32>
    %55 = tpu.matmul %54, %35, %cst_11 {dimension_numbers = #tpu.dot_dimension_numbers<[2], [1], [1], [2], [0, 0, 0, 1, 1, 2], [0], [0]>} : vector<4x8x8xf32>, vector<4x8x8xf32>, vector<4x8x8xf32> -> vector<4x8x8xf32>
    "tpu.trace_stop"() : () -> ()
    %c0_12 = arith.constant 0 : index
    %c0_13 = arith.constant 0 : index
    %c0_14 = arith.constant 0 : index
    %56 = vector.load %arg4[%c0_12, %c0_13, %c0_14] : memref<4x8x32xf32, #tpu.memory_space<vmem>>, vector<4x8x32xf32>
    "tpu.trace_start"() <{level = 10 : i32, message = "hqd,hdn->hqn"}> : () -> ()
    %cst_15 = arith.constant dense<0.000000e+00> : vector<4x8x32xf32>
    %57 = tpu.matmul %55, %56, %cst_15 {dimension_numbers = #tpu.dot_dimension_numbers<[2], [1], [1], [2], [0, 0, 0, 1, 1, 2], [0], [0]>} : vector<4x8x8xf32>, vector<4x8x32xf32>, vector<4x8x32xf32> -> vector<4x8x32xf32>
    "tpu.trace_stop"() : () -> ()
    %cst_16 = arith.constant dense<0.000000e+00> : vector<8x32xf32>
    %58 = vector.multi_reduction <add>, %57, %cst_16 [0] : vector<4x8x32xf32> to vector<8x32xf32>
    %c0_17 = arith.constant 0 : index
    %c0_18 = arith.constant 0 : index
    %59 = vector.load %arg5[%c0_17, %c0_18] : memref<1x32xf32, #tpu.memory_space<vmem>>, vector<1x32xf32>
    %60 = vector.broadcast %59 : vector<1x32xf32> to vector<8x32xf32>
    %61 = arith.addf %58, %60 : vector<8x32xf32>
    %c0_19 = arith.constant 0 : index
    %c0_20 = arith.constant 0 : index
    %c0_21 = arith.constant 0 : index
    %62 = vector.load %arg6[%c0_19, %c0_20, %c0_21] : memref<1x8x32xf32, #tpu.memory_space<vmem>>, vector<1x8x32xf32>
    %63 = vector.shape_cast %62 : vector<1x8x32xf32> to vector<8x32xf32>
    %64 = vector.shape_cast %61 : vector<8x32xf32> to vector<1x8x32xf32>
    tpu.vector_store %arg6[%c0_19, %c0_20, %c0_21], %64 {strides = array<i32>} : memref<1x8x32xf32, #tpu.memory_space<vmem>>, vector<1x8x32xf32>,
    return
  }
  func.func @transform_0(%arg0: i32) -> (i32, i32, i32) {
    %c0_i32 = arith.constant 0 : i32
    %c0_i32_0 = arith.constant 0 : i32
    %c0_i32_1 = arith.constant 0 : i32
    return %arg0, %c0_i32, %c0_i32_0 : i32, i32, i32
  }
  func.func @transform_1(%arg0: i32) -> (i32, i32) {
    %c0_i32 = arith.constant 0 : i32
    %c0_i32_0 = arith.constant 0 : i32
    %c0_i32_1 = arith.constant 0 : i32
    return %c0_i32, %c0_i32_0 : i32, i32
  }
  func.func @transform_2(%arg0: i32) -> (i32, i32) {
    %c0_i32 = arith.constant 0 : i32
    %c0_i32_0 = arith.constant 0 : i32
    %c0_i32_1 = arith.constant 0 : i32
    return %c0_i32, %c0_i32_0 : i32, i32
  }
  func.func @transform_3(%arg0: i32) -> (i32, i32, i32) {
    %c0_i32 = arith.constant 0 : i32
    %c0_i32_0 = arith.constant 0 : i32
    %c0_i32_1 = arith.constant 0 : i32
    %c0_i32_2 = arith.constant 0 : i32
    return %c0_i32, %c0_i32_0, %c0_i32_1 : i32, i32, i32
  }
  func.func @transform_4(%arg0: i32) -> (i32, i32) {
    %c0_i32 = arith.constant 0 : i32
    %c0_i32_0 = arith.constant 0 : i32
    %c0_i32_1 = arith.constant 0 : i32
    return %c0_i32, %c0_i32_0 : i32, i32
  }
  func.func @transform_5(%arg0: i32) -> (i32, i32, i32) {
    %c0_i32 = arith.constant 0 : i32
    %c0_i32_0 = arith.constant 0 : i32
    %c0_i32_1 = arith.constant 0 : i32
    return %arg0, %c0_i32, %c0_i32_0 : i32, i32, i32
  }
}

</mosaic_0001>

<llo_original>
// kernel: tpu_custom_call.1
$region0: #{tpu_custom_call.1}
  #allocation0 [shape = 'u32[]', space=smem, size = 0x4, offset = 0x4, fixed_abs, tag = 'smem constant byte address 0x4 - core index']
  #allocation1 [shape = 'u32[144,128]{1,0:T(1,128)}', space=vmem, size = 0x12000, scoped, tag = 'internal scratch']
  %s0 = inlined_call_operand.hbm [shape: f32[2,8,32], index: 0, kind: input, shape index: {}]
  %s1 = inlined_call_operand.hbm [shape: f32[32,96], index: 1, kind: input, shape index: {}]
  %s2 = inlined_call_operand.vmem [shape: f32[1,96], index: 2, kind: input, shape index: {}]
  %s3 = inlined_call_operand.hbm [shape: f32[4,8,32], index: 3, kind: input, shape index: {}]
  %s4 = inlined_call_operand.vmem [shape: f32[1,32], index: 4, kind: input, shape index: {}]
  %s5 = inlined_call_operand.hbm [shape: f32[2,8,32], index: 5, kind: output, shape index: {}]
  %s6 = sld [smem:[#allocation0]]
  $region65: #{tpu_custom_call.1} parent=0
    _
  %s8 = ssub.s32 1, %s6
  %s9 = scalar_select 0, %s8, %s6
  $region1: #{tpu_custom_call.1} parent=0
    #allocation2 [shape = 'u8[8192]{0}', space=vmem, size = 0x2000, scoped, tag = 'input window, operand 0']
    #allocation3 [shape = 's32[2]{0}', space=sflag, size = 0x8, scoped, tag = 'scoped memory for tpu_custom_call.1']
    #allocation4 [shape = 's32[2]{0}', space=sflag, size = 0x8, scoped, tag = 'scoped memory for tpu_custom_call.1']
    #allocation5 [shape = 'u8[16384]{0}', space=vmem, size = 0x4000, scoped, tag = 'input window, operand 1, single buffered']
    #allocation6 [shape = 's32[1]{0}', space=sflag, size = 0x4, scoped, tag = 'scoped memory for tpu_custom_call.1']
    #allocation7 [shape = 'u8[16384]{0}', space=vmem, size = 0x4000, scoped, tag = 'input window, operand 3, single buffered']
    #allocation8 [shape = 'u8[8192]{0}', space=vmem, size = 0x2000, scoped, tag = 'output window, operand 0']
    %10 = vsyncpa [#allocation3], 0
    %s11 = scalar_lea.sflag [#allocation3], 1
    %12 = vsyncpa %s11, 0
    %13 = vsyncpa [#allocation6], 0
    %14 = vsyncpa [#allocation4], 0
    %s15 = scalar_lea.sflag [#allocation4], 1
    %16 = vsyncpa %s15, 0
    loop: start=0, step=1, limit=4
    $region2: #{tpu_custom_call.1} parent=1 // loop_pre_header
      _
    $region3: #{tpu_custom_call.1} parent=1 // loop_header
      %s18 = sphi 0, %s22
      %p19 = scmp.ge.s32.totalorder %s18, 4
      %s28 = sphi 0, %s30
      %s31 = sphi 0, %s28
      %s32 = sphi 0, %s31
      %s48 = sphi 0, %s32
      %s52 = sphi 0, %s52
      %s54 = sphi 0, %s52
      %s55 = sphi 0, %s54
      %s69 = sphi 0, %s55
      %s73 = sphi 0, %s73
      %s75 = sphi 0, %s73
      %s76 = sphi 0, %s75
      %s90 = sphi 0, %s76
      %s94 = sphi 0, %s94
      %s96 = sphi 0, %s94
      %s97 = sphi 0, %s96
      %s111 = sphi 0, %s97
      %s115 = sphi 0, %s115
      %s117 = sphi 0, %s115
      %s118 = sphi 0, %s117
      %s132 = sphi 0, %s118
      %s138 = sphi 0, %s140
      %s141 = sphi 0, %s138
      %s142 = sphi 0, %s141
      %s158 = sphi 0, %s142
    $region4: #{tpu_custom_call.1} parent=1 // loop_header_branch
      %21 = sbr.rel (%p19) target = $region8
    $region5: #{tpu_custom_call.1} parent=1 // loop_body
      %s23 = ssub.s32 %s18, 1
      %s24 = ssub.s32 %s18, 2
      %s25 = sadd.s32 %s18, 1
      %s26 = ssub.s32 %s18, %s25
      %p27 = scmp.eq.s32.totalorder %s26, 0
      %s29 = sadd.s32 %s28, 1
      %s30 = scalar_select %p27, %s28, %s29
      %p33 = pneg %p27
      %p34 = scmp.eq.s32.totalorder %s18, 1
      %p35 = por %p33, %p34
      %p36 = scmp.ne.s32.totalorder %s28, %s31
      %p37 = scmp.eq.s32.totalorder %s18, 0
      %p38 = por %p36, %p37
      %p39 = scmp.ne.s32.totalorder %s28, %s31
      %p40 = scmp.eq.s32.totalorder %s23, 1
      %p41 = por %p39, %p40
      %p42 = scmp.ne.s32.totalorder %s31, %s32
      %p43 = scmp.eq.s32.totalorder %s23, 0
      %p44 = por %p42, %p43
      %p45 = scmp.ne.s32.totalorder %s31, %s32
      %p46 = scmp.eq.s32.totalorder %s24, 1
      %p47 = por %p45, %p46
      %p49 = scmp.ne.s32.totalorder %s32, %s48
      %p50 = scmp.eq.s32.totalorder %s24, 0
      %p51 = por %p49, %p50
      %s53 = sadd.s32 %s52, 1
      %p56 = scmp.eq.s32.totalorder %s18, 1
      %p57 = scmp.ne.s32.totalorder %s52, %s54
      %p58 = scmp.eq.s32.totalorder %s18, 0
      %p59 = por %p57, %p58
      %p60 = scmp.ne.s32.totalorder %s52, %s54
      %p61 = scmp.eq.s32.totalorder %s23, 1
      %p62 = por %p60, %p61
      %p63 = scmp.ne.s32.totalorder %s54, %s55
      %p64 = scmp.eq.s32.totalorder %s23, 0
      %p65 = por %p63, %p64
      %p66 = scmp.ne.s32.totalorder %s54, %s55
      %p67 = scmp.eq.s32.totalorder %s24, 1
      %p68 = por %p66, %p67
      %p70 = scmp.ne.s32.totalorder %s55, %s69
      %p71 = scmp.eq.s32.totalorder %s24, 0
      %p72 = por %p70, %p71
      %s74 = sadd.s32 %s73, 1
      %p77 = scmp.eq.s32.totalorder %s18, 1
      %p78 = scmp.ne.s32.totalorder %s73, %s75
      %p79 = scmp.eq.s32.totalorder %s18, 0
      %p80 = por %p78, %p79
      %p81 = scmp.ne.s32.totalorder %s73, %s75
      %p82 = scmp.eq.s32.totalorder %s23, 1
      %p83 = por %p81, %p82
      %p84 = scmp.ne.s32.totalorder %s75, %s76
      %p85 = scmp.eq.s32.totalorder %s23, 0
      %p86 = por %p84, %p85
      %p87 = scmp.ne.s32.totalorder %s75, %s76
      %p88 = scmp.eq.s32.totalorder %s24, 1
      %p89 = por %p87, %p88
      %p91 = scmp.ne.s32.totalorder %s76, %s90
      %p92 = scmp.eq.s32.totalorder %s24, 0
      %p93 = por %p91, %p92
      %s95 = sadd.s32 %s94, 1
      %p98 = scmp.eq.s32.totalorder %s18, 1
      %p99 = scmp.ne.s32.totalorder %s94, %s96
      %p100 = scmp.eq.s32.totalorder %s18, 0
      %p101 = por %p99, %p100
      %p102 = scmp.ne.s32.totalorder %s94, %s96
      %p103 = scmp.eq.s32.totalorder %s23, 1
      %p104 = por %p102, %p103
      %p105 = scmp.ne.s32.totalorder %s96, %s97
      %p106 = scmp.eq.s32.totalorder %s23, 0
      %p107 = por %p105, %p106
      %p108 = scmp.ne.s32.totalorder %s96, %s97
      %p109 = scmp.eq.s32.totalorder %s24, 1
      %p110 = por %p108, %p109
      %p112 = scmp.ne.s32.totalorder %s97, %s111
      %p113 = scmp.eq.s32.totalorder %s24, 0
      %p114 = por %p112, %p113
      %s116 = sadd.s32 %s115, 1
      %p119 = scmp.eq.s32.totalorder %s18, 1
      %p120 = scmp.ne.s32.totalorder %s115, %s117
      %p121 = scmp.eq.s32.totalorder %s18, 0
      %p122 = por %p120, %p121
      %p123 = scmp.ne.s32.totalorder %s115, %s117
      %p124 = scmp.eq.s32.totalorder %s23, 1
      %p125 = por %p123, %p124
      %p126 = scmp.ne.s32.totalorder %s117, %s118
      %p127 = scmp.eq.s32.totalorder %s23, 0
      %p128 = por %p126, %p127
      %p129 = scmp.ne.s32.totalorder %s117, %s118
      %p130 = scmp.eq.s32.totalorder %s24, 1
      %p131 = por %p129, %p130
      %p133 = scmp.ne.s32.totalorder %s118, %s132
      %p134 = scmp.eq.s32.totalorder %s24, 0
      %p135 = por %p133, %p134
      %s136 = ssub.s32 %s18, %s25
      %p137 = scmp.eq.s32.totalorder %s136, 0
      %s139 = sadd.s32 %s138, 1
      %s140 = scalar_select %p137, %s138, %s139
      %p143 = pneg %p137
      %p144 = scmp.eq.s32.totalorder %s18, 1
      %p145 = por %p143, %p144
      %p146 = scmp.ne.s32.totalorder %s138, %s141
      %p147 = scmp.eq.s32.totalorder %s18, 0
      %p148 = por %p146, %p147
      %p149 = scmp.ne.s32.totalorder %s138, %s141
      %p150 = scmp.eq.s32.totalorder %s23, 1
      %p151 = por %p149, %p150
      %p152 = scmp.ne.s32.totalorder %s141, %s142
      %p153 = scmp.eq.s32.totalorder %s23, 0
      %p154 = por %p152, %p153
      %p155 = scmp.ne.s32.totalorder %s141, %s142
      %p156 = scmp.eq.s32.totalorder %s24, 1
      %p157 = por %p155, %p156
      %p159 = scmp.ne.s32.totalorder %s142, %s158
      %p160 = scmp.eq.s32.totalorder %s24, 0
      %p161 = por %p159, %p160
      %p162 = scmp.le.s32.totalorder 1, %s18
      %p163 = scmp.lt.s32.totalorder %s18, 3
      %p164 = pnand %p162, %p163
      %p165 = pneg %p164
      // Predicated region
      $region9: #{tpu_custom_call.1} parent=5 // pred_check
        _
      $region10: #{tpu_custom_call.1} parent=5 // pred_check_branch
        %167 = sbr.rel (%p164) target = $region12
      $region11: #{tpu_custom_call.1} parent=5 // pred_region
        %s168 = ssub.s32 %s18, 1
        // Predicated region
        $region13: #{tpu_custom_call.1} parent=11 // pred_check
          %p169 = pneg %p65
        $region14: #{tpu_custom_call.1} parent=11 // pred_check_branch
          %171 = sbr.rel (%p169) target = $region16
        $region15: #{tpu_custom_call.1} parent=11 // pred_region
          %s173 = ssub.s32 512, 512
          %174 = vsyncadd [#allocation6], %s173
          %s175 = sshll.u32 [#allocation5], 4
          %s176 = int_to_ptr.vmem [resolvable:$true] %s175
          %181 = dma.hbm_to_vmem [thread:$0]  %s1, 512, %s176, [#allocation6], 128, 128, 8
        $region16: #{tpu_custom_call.1} parent=11 // pred_fallthru
          _
        // Predicated region
        $region17: #{tpu_custom_call.1} parent=11 // pred_check
          %p182 = pneg %p86
        $region18: #{tpu_custom_call.1} parent=11 // pred_check_branch
          %184 = sbr.rel (%p182) target = $region20
        $region19: #{tpu_custom_call.1} parent=11 // pred_region
          _
        $region20: #{tpu_custom_call.1} parent=11 // pred_fallthru
          _
        // Predicated region
        $region21: #{tpu_custom_call.1} parent=11 // pred_check
          %p185 = pneg %p107
        $region22: #{tpu_custom_call.1} parent=11 // pred_check_branch
          %187 = sbr.rel (%p185) target = $region24
        $region23: #{tpu_custom_call.1} parent=11 // pred_region
          %s189 = ssub.s32 512, 512
          %190 = vsyncadd [#allocation6], %s189
          %s191 = sshll.u32 [#allocation7], 4
          %s192 = int_to_ptr.vmem [resolvable:$true] %s191
          %197 = dma.hbm_to_vmem [thread:$0]  %s3, 512, %s192, [#allocation6], 128, 128, 8
        $region24: #{tpu_custom_call.1} parent=11 // pred_fallthru
          _
        // Predicated region
        $region25: #{tpu_custom_call.1} parent=11 // pred_check
          %p198 = pneg %p128
        $region26: #{tpu_custom_call.1} parent=11 // pred_check_branch
          %200 = sbr.rel (%p198) target = $region28
        $region27: #{tpu_custom_call.1} parent=11 // pred_region
          _
        $region28: #{tpu_custom_call.1} parent=11 // pred_fallthru
          _
      $region12: #{tpu_custom_call.1} parent=5 // pred_fallthru
        _
      %p201 = scmp.lt.s32.totalorder %s18, 2
      // Predicated region
      $region29: #{tpu_custom_call.1} parent=5 // pred_check
        %p202 = pneg %p201
      $region30: #{tpu_custom_call.1} parent=5 // pred_check_branch
        %204 = sbr.rel (%p202) target = $region32
      $region31: #{tpu_custom_call.1} parent=5 // pred_region
        // Predicated region
        $region33: #{tpu_custom_call.1} parent=31 // pred_check
          %p205 = pneg %p38
        $region34: #{tpu_custom_call.1} parent=31 // pred_check_branch
          %207 = sbr.rel (%p205) target = $region36
        $region35: #{tpu_custom_call.1} parent=31 // pred_region
          %s208 = sand.u32 %s28, 1
          %s209 = scalar_lea.sflag [#allocation3], %s208
          %s210 = sand.u32 %s28, 1
          %s211 = smul.addr %s210, 8
          %s212 = scalar_lea.vmem [#allocation2], %s211
          %s214 = ssub.s32 128, 128
          %215 = vsyncadd %s209, %s214
          %s216 = smul.addr %s18, 128
          %s217 = scalar_lea.hbm %s0, %s216
          %s219 = sshll.u32 %s212, 4
          %s220 = int_to_ptr.vmem [resolvable:$true] %s219
          %222 = dma.hbm_to_vmem [thread:$0]  %s217, 128, %s220, %s209
        $region36: #{tpu_custom_call.1} parent=31 // pred_fallthru
          _
      $region32: #{tpu_custom_call.1} parent=5 // pred_fallthru
        _
      %p223 = scmp.le.s32.totalorder 1, %s18
      %p224 = scmp.lt.s32.totalorder %s18, 3
      %p225 = pnand %p223, %p224
      %p226 = pneg %p225
      // Predicated region
      $region37: #{tpu_custom_call.1} parent=5 // pred_check
        _
      $region38: #{tpu_custom_call.1} parent=5 // pred_check_branch
        %228 = sbr.rel (%p225) target = $region40
      $region39: #{tpu_custom_call.1} parent=5 // pred_region
        %s229 = ssub.s32 %s18, 1
        %s230 = sand.u32 %s31, 1
        %s231 = scalar_lea.sflag [#allocation3], %s230
        %s232 = sand.u32 %s31, 1
        %s233 = smul.addr %s232, 8
        %s234 = scalar_lea.vmem [#allocation2], %s233
        // Predicated region
        $region41: #{tpu_custom_call.1} parent=39 // pred_check
          %p235 = pneg %p44
        $region42: #{tpu_custom_call.1} parent=39 // pred_check_branch
          %237 = sbr.rel (%p235) target = $region44
        $region43: #{tpu_custom_call.1} parent=39 // pred_region
          %238 = dma.done %s231, 128
        $region44: #{tpu_custom_call.1} parent=39 // pred_fallthru
          _
        // Predicated region
        $region45: #{tpu_custom_call.1} parent=39 // pred_check
          %p239 = pneg %p65
        $region46: #{tpu_custom_call.1} parent=39 // pred_check_branch
          %241 = sbr.rel (%p239) target = $region48
        $region47: #{tpu_custom_call.1} parent=39 // pred_region
          %242 = dma.done [#allocation6], 512
        $region48: #{tpu_custom_call.1} parent=39 // pred_fallthru
          _
        // Predicated region
        $region49: #{tpu_custom_call.1} parent=39 // pred_check
          %p243 = pneg %p107
        $region50: #{tpu_custom_call.1} parent=39 // pred_check_branch
          %245 = sbr.rel (%p243) target = $region52
        $region51: #{tpu_custom_call.1} parent=39 // pred_region
          %246 = dma.done [#allocation6], 512
        $region52: #{tpu_custom_call.1} parent=39 // pred_fallthru
          _
        %s247 = sand.u32 %s31, 1
        %s248 = scalar_lea.sflag [#allocation3], %s247
        %s249 = sand.u32 %s31, 1
        %s250 = smul.addr %s249, 8
        %s251 = scalar_lea.vmem [#allocation2], %s250
        %p252 = pneg %p44
        %p253 = pneg %p41
        %p254 = pneg %p65
        %p255 = pneg %p62
        %p256 = pneg %p86
        %p257 = pneg %p83
        %p258 = pneg %p107
        %p259 = pneg %p104
        %p260 = pneg %p128
        %p261 = pneg %p125
        %p262 = pneg %p154
        %p263 = pneg %p151
        %s264 = sand.u32 %s141, 1
        %s265 = scalar_lea.sflag [#allocation4], %s264
        %s266 = sand.u32 %s141, 1
        %s267 = smul.addr %s266, 8
        %s268 = scalar_lea.vmem [#allocation8], %s267
        %v269 = vld [vmem:[%s234] sm:$0xff]
        %v270 = vld [vmem:[#allocation5] sm:$0xff]
        %v271 = vld [vmem:[#allocation5 + $0x8] sm:$0xff]
        %v272 = vld [vmem:[#allocation5 + $0x10] sm:$0xff]
        %v273 = vld [vmem:[#allocation5 + $0x18] sm:$0xff]
        %v274 = vld [vmem:[%s2] sm:$0x1]
        %v276 = vlaneseq
        %v277 = vshrl.u32 %v276, 7
        %v278 = vsub.s32 0, %v277
        %v279 = vrot.slane %v274, %v278
        %vm281 = vcmask 261120
        %v283 = vsel %vm281, %v269, 0
        %285 = vmatprep.subr.mxu0 0.0
        %286 = vmatpush1.msra.mxu0 0.0
        %287 = vmatprep.subr.mxu0 0.0
        %288 = vmatpush1.msra.mxu0 0.0
        %289 = vmatprep.subr.mxu0 0.0
        %290 = vmatpush1.msra.mxu0 0.0
        %291 = vmatprep.subr.mxu0 0.0
        %292 = vmatpush1.msra.mxu0 0.0
        %293 = vmatprep.subr.mxu0 0.0
        %294 = vmatpush1.msra.mxu0 0.0
        %295 = vmatprep.subr.mxu0 0.0
        %296 = vmatpush1.msra.mxu0 0.0
        %297 = vmatprep.subr.mxu0 0.0
        %298 = vmatpush1.msra.mxu0 0.0
        %299 = vmatprep.subr.mxu0 0.0
        %300 = vmatpush1.msra.mxu0 0.0
        %301 = vmatprep.subr.mxu0 0.0
        %302 = vmatpush1.msra.mxu0 0.0
        %303 = vmatprep.subr.mxu0 0.0
        %304 = vmatpush1.msra.mxu0 0.0
        %305 = vmatprep.subr.mxu0 0.0
        %306 = vmatpush1.msra.mxu0 0.0
        %307 = vmatprep.subr.mxu0 0.0
        %308 = vmatpush1.msra.mxu0 0.0
        %309 = vmatprep.subr.mxu0 0.0
        %310 = vmatpush1.msra.mxu0 %v273
        %311 = vmatprep.subr.mxu0 0.0
        %312 = vmatpush1.msra.mxu0 %v272
        %313 = vmatprep.subr.mxu0 0.0
        %314 = vmatpush1.msra.mxu0 %v271
        %315 = vmatprep.subr.mxu0 0.0
        %316 = vmatpush1.msra.mxu0 %v270
        %317 = vmatprep.subr.mxu0 0.0
        %318 = vmatpush2.msra.mxu0 0.0
        %319 = vmatprep.subr.mxu0 0.0
        %320 = vmatpush2.msra.mxu0 0.0
        %321 = vmatprep.subr.mxu0 0.0
        %322 = vmatpush2.msra.mxu0 0.0
        %323 = vmatprep.subr.mxu0 0.0
        %324 = vmatpush2.msra.mxu0 0.0
        %325 = vmatprep.subr.mxu0 0.0
        %326 = vmatpush2.msra.mxu0 0.0
        %327 = vmatprep.subr.mxu0 0.0
        %328 = vmatpush2.msra.mxu0 0.0
        %329 = vmatprep.subr.mxu0 0.0
        %330 = vmatpush2.msra.mxu0 0.0
        %331 = vmatprep.subr.mxu0 0.0
        %332 = vmatpush2.msra.mxu0 0.0
        %333 = vmatprep.subr.mxu0 0.0
        %334 = vmatpush2.msra.mxu0 0.0
        %335 = vmatprep.subr.mxu0 0.0
        %336 = vmatpush2.msra.mxu0 0.0
        %337 = vmatprep.subr.mxu0 0.0
        %338 = vmatpush2.msra.mxu0 0.0
        %339 = vmatprep.subr.mxu0 0.0
        %340 = vmatpush2.msra.mxu0 0.0
        %341 = vmatprep.subr.mxu0 0.0
        %342 = vmatpush2.msra.mxu0 0.0
        %343 = vmatprep.subr.mxu0 0.0
        %344 = vmatpush2.msra.mxu0 0.0
        %345 = vmatprep.subr.mxu0 0.0
        %346 = vmatpush2.msra.mxu0 0.0
        %347 = vmatprep.subr.mxu0 0.0
        %348 = vmatpush2.msra.mxu0 0.0
        %349 = vmatprep.mubr.f32.mxu0 0.0
        %350 = vmatmul.mubr.f32.gmra.mxu0 %v283
        %v351 = vpop.f32.mrf.mxu0
        %v352 = vadd.f32 %v279, %v351
        %v353 = vpop.f32.mrf.mxu0
        %354 = vdwg.mxu0
        %356 = vrot.lane.b32.xlu0 %v352, 120
        %v357 = vpop.permute.xlu0 %356
        %359 = vrot.lane.b32.xlu0 %v352, 112
        %v360 = vpop.permute.xlu0 %359
        %362 = vrot.lane.b32.xlu0 %v352, 104
        %v363 = vpop.permute.xlu0 %362
        %v365 = vmul.f32 %v352, 0.35355338
        %v366 = vmul.f32 %v357, 0.35355338
        %v367 = vmul.f32 %v360, 0.35355338
        %v368 = vmul.f32 %v363, 0.35355338
        %369 = vrot.lane.b32.xlu0 %v352, 96
        %v370 = vpop.permute.xlu0 %369
        %vm371 = vcmask 64512
        %v373 = vsel %vm371, %v365, 0
        %v375 = vsel %vm371, %v370, 0
        %377 = vmatprep.subr.mxu0 0.0
        %378 = vmatpush1.xpose.msra.mxu0 0.0
        %379 = vmatprep.subr.mxu0 0.0
        %380 = vmatpush1.xpose.msra.mxu0 0.0
        %381 = vmatprep.subr.mxu0 0.0
        %382 = vmatpush1.xpose.msra.mxu0 0.0
        %383 = vmatprep.subr.mxu0 0.0
        %384 = vmatpush1.xpose.msra.mxu0 0.0
        %385 = vmatprep.subr.mxu0 0.0
        %386 = vmatpush1.xpose.msra.mxu0 0.0
        %387 = vmatprep.subr.mxu0 0.0
        %388 = vmatpush1.xpose.msra.mxu0 0.0
        %389 = vmatprep.subr.mxu0 0.0
        %390 = vmatpush1.xpose.msra.mxu0 0.0
        %391 = vmatprep.subr.mxu0 0.0
        %392 = vmatpush1.xpose.msra.mxu0 0.0
        %393 = vmatprep.subr.mxu0 0.0
        %394 = vmatpush1.xpose.msra.mxu0 0.0
        %395 = vmatprep.subr.mxu0 0.0
        %396 = vmatpush1.xpose.msra.mxu0 0.0
        %397 = vmatprep.subr.mxu0 0.0
        %398 = vmatpush1.xpose.msra.mxu0 0.0
        %399 = vmatprep.subr.mxu0 0.0
        %400 = vmatpush1.xpose.msra.mxu0 0.0
        %401 = vmatprep.subr.mxu0 0.0
        %402 = vmatpush1.xpose.msra.mxu0 0.0
        %403 = vmatprep.subr.mxu0 0.0
        %404 = vmatpush1.xpose.msra.mxu0 0.0
        %405 = vmatprep.subr.mxu0 0.0
        %406 = vmatpush1.xpose.msra.mxu0 0.0
        %407 = vmatprep.subr.mxu0 0.0
        %408 = vmatpush1.xpose.msra.mxu0 %v375
        %409 = vmatprep.subr.mxu0 0.0
        %410 = vmatpush2.xpose.msra.mxu0 0.0
        %411 = vmatprep.subr.mxu0 0.0
        %412 = vmatpush2.xpose.msra.mxu0 0.0
        %413 = vmatprep.subr.mxu0 0.0
        %414 = vmatpush2.xpose.msra.mxu0 0.0
        %415 = vmatprep.subr.mxu0 0.0
        %416 = vmatpush2.xpose.msra.mxu0 0.0
        %417 = vmatprep.subr.mxu0 0.0
        %418 = vmatpush2.xpose.msra.mxu0 0.0
        %419 = vmatprep.subr.mxu0 0.0
        %420 = vmatpush2.xpose.msra.mxu0 0.0
        %421 = vmatprep.subr.mxu0 0.0
        %422 = vmatpush2.xpose.msra.mxu0 0.0
        %423 = vmatprep.subr.mxu0 0.0
        %424 = vmatpush2.xpose.msra.mxu0 0.0
        %425 = vmatprep.subr.mxu0 0.0
        %426 = vmatpush2.xpose.msra.mxu0 0.0
        %427 = vmatprep.subr.mxu0 0.0
        %428 = vmatpush2.xpose.msra.mxu0 0.0
        %429 = vmatprep.subr.mxu0 0.0
        %430 = vmatpush2.xpose.msra.mxu0 0.0
        %431 = vmatprep.subr.mxu0 0.0
        %432 = vmatpush2.xpose.msra.mxu0 0.0
        %433 = vmatprep.subr.mxu0 0.0
        %434 = vmatpush2.xpose.msra.mxu0 0.0
        %435 = vmatprep.subr.mxu0 0.0
        %436 = vmatpush2.xpose.msra.mxu0 0.0
        %437 = vmatprep.subr.mxu0 0.0
        %438 = vmatpush2.xpose.msra.mxu0 0.0
        %439 = vmatprep.subr.mxu0 0.0
        %440 = vmatpush2.xpose.msra.mxu0 0.0
        %441 = vmatprep.mubr.f32.mxu0 0.0
        %442 = vmatmul.mubr.f32.gmra.mxu0 %v373
        %v443 = vpop.f32.mrf.mxu0
        %v444 = vadd.f32 0.0, %v443
        %v445 = vpop.f32.mrf.mxu0
        %446 = vdwg.mxu0
        %447 = vrot.lane.b32.xlu0 %v357, 96
        %v448 = vpop.permute.xlu0 %447
        %v450 = vsel %vm371, %v366, 0
        %v452 = vsel %vm371, %v448, 0
        %454 = vmatprep.subr.mxu0 0.0
        %455 = vmatpush1.xpose.msra.mxu0 0.0
        %456 = vmatprep.subr.mxu0 0.0
        %457 = vmatpush1.xpose.msra.mxu0 0.0
        %458 = vmatprep.subr.mxu0 0.0
        %459 = vmatpush1.xpose.msra.mxu0 0.0
        %460 = vmatprep.subr.mxu0 0.0
        %461 = vmatpush1.xpose.msra.mxu0 0.0
        %462 = vmatprep.subr.mxu0 0.0
        %463 = vmatpush1.xpose.msra.mxu0 0.0
        %464 = vmatprep.subr.mxu0 0.0
        %465 = vmatpush1.xpose.msra.mxu0 0.0
        %466 = vmatprep.subr.mxu0 0.0
        %467 = vmatpush1.xpose.msra.mxu0 0.0
        %468 = vmatprep.subr.mxu0 0.0
        %469 = vmatpush1.xpose.msra.mxu0 0.0
        %470 = vmatprep.subr.mxu0 0.0
        %471 = vmatpush1.xpose.msra.mxu0 0.0
        %472 = vmatprep.subr.mxu0 0.0
        %473 = vmatpush1.xpose.msra.mxu0 0.0
        %474 = vmatprep.subr.mxu0 0.0
        %475 = vmatpush1.xpose.msra.mxu0 0.0
        %476 = vmatprep.subr.mxu0 0.0
        %477 = vmatpush1.xpose.msra.mxu0 0.0
        %478 = vmatprep.subr.mxu0 0.0
        %479 = vmatpush1.xpose.msra.mxu0 0.0
        %480 = vmatprep.subr.mxu0 0.0
        %481 = vmatpush1.xpose.msra.mxu0 0.0
        %482 = vmatprep.subr.mxu0 0.0
        %483 = vmatpush1.xpose.msra.mxu0 0.0
        %484 = vmatprep.subr.mxu0 0.0
        %485 = vmatpush1.xpose.msra.mxu0 %v452
        %486 = vmatprep.subr.mxu0 0.0
        %487 = vmatpush2.xpose.msra.mxu0 0.0
        %488 = vmatprep.subr.mxu0 0.0
        %489 = vmatpush2.xpose.msra.mxu0 0.0
        %490 = vmatprep.subr.mxu0 0.0
        %491 = vmatpush2.xpose.msra.mxu0 0.0
        %492 = vmatprep.subr.mxu0 0.0
        %493 = vmatpush2.xpose.msra.mxu0 0.0
        %494 = vmatprep.subr.mxu0 0.0
        %495 = vmatpush2.xpose.msra.mxu0 0.0
        %496 = vmatprep.subr.mxu0 0.0
        %497 = vmatpush2.xpose.msra.mxu0 0.0
        %498 = vmatprep.subr.mxu0 0.0
        %499 = vmatpush2.xpose.msra.mxu0 0.0
        %500 = vmatprep.subr.mxu0 0.0
        %501 = vmatpush2.xpose.msra.mxu0 0.0
        %502 = vmatprep.subr.mxu0 0.0
        %503 = vmatpush2.xpose.msra.mxu0 0.0
        %504 = vmatprep.subr.mxu0 0.0
        %505 = vmatpush2.xpose.msra.mxu0 0.0
        %506 = vmatprep.subr.mxu0 0.0
        %507 = vmatpush2.xpose.msra.mxu0 0.0
        %508 = vmatprep.subr.mxu0 0.0
        %509 = vmatpush2.xpose.msra.mxu0 0.0
        %510 = vmatprep.subr.mxu0 0.0
        %511 = vmatpush2.xpose.msra.mxu0 0.0
        %512 = vmatprep.subr.mxu0 0.0
        %513 = vmatpush2.xpose.msra.mxu0 0.0
        %514 = vmatprep.subr.mxu0 0.0
        %515 = vmatpush2.xpose.msra.mxu0 0.0
        %516 = vmatprep.subr.mxu0 0.0
        %517 = vmatpush2.xpose.msra.mxu0 0.0
        %518 = vmatprep.mubr.f32.mxu0 0.0
        %519 = vmatmul.mubr.f32.gmra.mxu0 %v450
        %v520 = vpop.f32.mrf.mxu0
        %v521 = vadd.f32 0.0, %v520
        %v522 = vpop.f32.mrf.mxu0
        %523 = vdwg.mxu0
        %524 = vrot.lane.b32.xlu0 %v360, 96
        %v525 = vpop.permute.xlu0 %524
        %v527 = vsel %vm371, %v367, 0
        %v529 = vsel %vm371, %v525, 0
        %531 = vmatprep.subr.mxu0 0.0
        %532 = vmatpush1.xpose.msra.mxu0 0.0
        %533 = vmatprep.subr.mxu0 0.0
        %534 = vmatpush1.xpose.msra.mxu0 0.0
        %535 = vmatprep.subr.mxu0 0.0
        %536 = vmatpush1.xpose.msra.mxu0 0.0
        %537 = vmatprep.subr.mxu0 0.0
        %538 = vmatpush1.xpose.msra.mxu0 0.0
        %539 = vmatprep.subr.mxu0 0.0
        %540 = vmatpush1.xpose.msra.mxu0 0.0
        %541 = vmatprep.subr.mxu0 0.0
        %542 = vmatpush1.xpose.msra.mxu0 0.0
        %543 = vmatprep.subr.mxu0 0.0
        %544 = vmatpush1.xpose.msra.mxu0 0.0
        %545 = vmatprep.subr.mxu0 0.0
        %546 = vmatpush1.xpose.msra.mxu0 0.0
        %547 = vmatprep.subr.mxu0 0.0
        %548 = vmatpush1.xpose.msra.mxu0 0.0
        %549 = vmatprep.subr.mxu0 0.0
        %550 = vmatpush1.xpose.msra.mxu0 0.0
        %551 = vmatprep.subr.mxu0 0.0
        %552 = vmatpush1.xpose.msra.mxu0 0.0
        %553 = vmatprep.subr.mxu0 0.0
        %554 = vmatpush1.xpose.msra.mxu0 0.0
        %555 = vmatprep.subr.mxu0 0.0
        %556 = vmatpush1.xpose.msra.mxu0 0.0
        %557 = vmatprep.subr.mxu0 0.0
        %558 = vmatpush1.xpose.msra.mxu0 0.0
        %559 = vmatprep.subr.mxu0 0.0
        %560 = vmatpush1.xpose.msra.mxu0 0.0
        %561 = vmatprep.subr.mxu0 0.0
        %562 = vmatpush1.xpose.msra.mxu0 %v529
        %563 = vmatprep.subr.mxu0 0.0
        %564 = vmatpush2.xpose.msra.mxu0 0.0
        %565 = vmatprep.subr.mxu0 0.0
        %566 = vmatpush2.xpose.msra.mxu0 0.0
        %567 = vmatprep.subr.mxu0 0.0
        %568 = vmatpush2.xpose.msra.mxu0 0.0
        %569 = vmatprep.subr.mxu0 0.0
        %570 = vmatpush2.xpose.msra.mxu0 0.0
        %571 = vmatprep.subr.mxu0 0.0
        %572 = vmatpush2.xpose.msra.mxu0 0.0
        %573 = vmatprep.subr.mxu0 0.0
        %574 = vmatpush2.xpose.msra.mxu0 0.0
        %575 = vmatprep.subr.mxu0 0.0
        %576 = vmatpush2.xpose.msra.mxu0 0.0
        %577 = vmatprep.subr.mxu0 0.0
        %578 = vmatpush2.xpose.msra.mxu0 0.0
        %579 = vmatprep.subr.mxu0 0.0
        %580 = vmatpush2.xpose.msra.mxu0 0.0
        %581 = vmatprep.subr.mxu0 0.0
        %582 = vmatpush2.xpose.msra.mxu0 0.0
        %583 = vmatprep.subr.mxu0 0.0
        %584 = vmatpush2.xpose.msra.mxu0 0.0
        %585 = vmatprep.subr.mxu0 0.0
        %586 = vmatpush2.xpose.msra.mxu0 0.0
        %587 = vmatprep.subr.mxu0 0.0
        %588 = vmatpush2.xpose.msra.mxu0 0.0
        %589 = vmatprep.subr.mxu0 0.0
        %590 = vmatpush2.xpose.msra.mxu0 0.0
        %591 = vmatprep.subr.mxu0 0.0
        %592 = vmatpush2.xpose.msra.mxu0 0.0
        %593 = vmatprep.subr.mxu0 0.0
        %594 = vmatpush2.xpose.msra.mxu0 0.0
        %595 = vmatprep.mubr.f32.mxu0 0.0
        %596 = vmatmul.mubr.f32.gmra.mxu0 %v527
        %v597 = vpop.f32.mrf.mxu0
        %v598 = vadd.f32 0.0, %v597
        %v599 = vpop.f32.mrf.mxu0
        %600 = vdwg.mxu0
        %601 = vrot.lane.b32.xlu0 %v363, 96
        %v602 = vpop.permute.xlu0 %601
        %v604 = vsel %vm371, %v368, 0
        %v606 = vsel %vm371, %v602, 0
        %608 = vmatprep.subr.mxu0 0.0
        %609 = vmatpush1.xpose.msra.mxu0 0.0
        %610 = vmatprep.subr.mxu0 0.0
        %611 = vmatpush1.xpose.msra.mxu0 0.0
        %612 = vmatprep.subr.mxu0 0.0
        %613 = vmatpush1.xpose.msra.mxu0 0.0
        %614 = vmatprep.subr.mxu0 0.0
        %615 = vmatpush1.xpose.msra.mxu0 0.0
        %616 = vmatprep.subr.mxu0 0.0
        %617 = vmatpush1.xpose.msra.mxu0 0.0
        %618 = vmatprep.subr.mxu0 0.0
        %619 = vmatpush1.xpose.msra.mxu0 0.0
        %620 = vmatprep.subr.mxu0 0.0
        %621 = vmatpush1.xpose.msra.mxu0 0.0
        %622 = vmatprep.subr.mxu0 0.0
        %623 = vmatpush1.xpose.msra.mxu0 0.0
        %624 = vmatprep.subr.mxu0 0.0
        %625 = vmatpush1.xpose.msra.mxu0 0.0
        %626 = vmatprep.subr.mxu0 0.0
        %627 = vmatpush1.xpose.msra.mxu0 0.0
        %628 = vmatprep.subr.mxu0 0.0
        %629 = vmatpush1.xpose.msra.mxu0 0.0
        %630 = vmatprep.subr.mxu0 0.0
        %631 = vmatpush1.xpose.msra.mxu0 0.0
        %632 = vmatprep.subr.mxu0 0.0
        %633 = vmatpush1.xpose.msra.mxu0 0.0
        %634 = vmatprep.subr.mxu0 0.0
        %635 = vmatpush1.xpose.msra.mxu0 0.0
        %636 = vmatprep.subr.mxu0 0.0
        %637 = vmatpush1.xpose.msra.mxu0 0.0
        %638 = vmatprep.subr.mxu0 0.0
        %639 = vmatpush1.xpose.msra.mxu0 %v606
        %640 = vmatprep.subr.mxu0 0.0
        %641 = vmatpush2.xpose.msra.mxu0 0.0
        %642 = vmatprep.subr.mxu0 0.0
        %643 = vmatpush2.xpose.msra.mxu0 0.0
        %644 = vmatprep.subr.mxu0 0.0
        %645 = vmatpush2.xpose.msra.mxu0 0.0
        %646 = vmatprep.subr.mxu0 0.0
        %647 = vmatpush2.xpose.msra.mxu0 0.0
        %648 = vmatprep.subr.mxu0 0.0
        %649 = vmatpush2.xpose.msra.mxu0 0.0
        %650 = vmatprep.subr.mxu0 0.0
        %651 = vmatpush2.xpose.msra.mxu0 0.0
        %652 = vmatprep.subr.mxu0 0.0
        %653 = vmatpush2.xpose.msra.mxu0 0.0
        %654 = vmatprep.subr.mxu0 0.0
        %655 = vmatpush2.xpose.msra.mxu0 0.0
        %656 = vmatprep.subr.mxu0 0.0
        %657 = vmatpush2.xpose.msra.mxu0 0.0
        %658 = vmatprep.subr.mxu0 0.0
        %659 = vmatpush2.xpose.msra.mxu0 0.0
        %660 = vmatprep.subr.mxu0 0.0
        %661 = vmatpush2.xpose.msra.mxu0 0.0
        %662 = vmatprep.subr.mxu0 0.0
        %663 = vmatpush2.xpose.msra.mxu0 0.0
        %664 = vmatprep.subr.mxu0 0.0
        %665 = vmatpush2.xpose.msra.mxu0 0.0
        %666 = vmatprep.subr.mxu0 0.0
        %667 = vmatpush2.xpose.msra.mxu0 0.0
        %668 = vmatprep.subr.mxu0 0.0
        %669 = vmatpush2.xpose.msra.mxu0 0.0
        %670 = vmatprep.subr.mxu0 0.0
        %671 = vmatpush2.xpose.msra.mxu0 0.0
        %672 = vmatprep.mubr.f32.mxu0 0.0
        %673 = vmatmul.mubr.f32.gmra.mxu0 %v604
        %v674 = vpop.f32.mrf.mxu0
        %v675 = vadd.f32 0.0, %v674
        %v676 = vpop.f32.mrf.mxu0
        %677 = vdwg.mxu0
        %v678 = vlaneseq
        %v679 = vshrl.u32 %v678, 7
        %v680 = vlaneseq
        %v681 = vand.u32 %v680, 127
        %vm682 = vcmp.le.s32.totalorder %v681, %v679
        %v683 = vsel %vm682, 1, 0
        %vm684 = vcmp.eq.s32.totalorder %v683, 1
        %v685 = vsel %vm684, %v444, -10000.0
        %v686 = vsel %vm684, %v521, -10000.0
        %v687 = vsel %vm684, %v598, -10000.0
        %v688 = vsel %vm684, %v675, -10000.0
        %v689 = vsel %vm371, %v685, -inf
        %690 = vmax.xlane.f32.xlu0 %v689
        %v691 = vpop.xlane.xlu0 %690
        %v692 = vsel %vm371, %v686, -inf
        %693 = vmax.xlane.f32.xlu0 %v692
        %v694 = vpop.xlane.xlu0 %693
        %v695 = vsel %vm371, %v687, -inf
        %696 = vmax.xlane.f32.xlu0 %v695
        %v697 = vpop.xlane.xlu0 %696
        %v698 = vsel %vm371, %v688, -inf
        %699 = vmax.xlane.f32.xlu0 %v698
        %v700 = vpop.xlane.xlu0 %699
        %v701 = vsub.f32 %v685, %v691
        %v702 = vsub.f32 %v686, %v694
        %v703 = vsub.f32 %v687, %v697
        %v704 = vsub.f32 %v688, %v700
        %v705 = vmul.f32 %v701, 1.442695
        %v706 = vpow.pop %v705
        %v707 = vmul.f32 %v702, 1.442695
        %v708 = vpow.pop %v707
        %v709 = vmul.f32 %v703, 1.442695
        %v710 = vpow.pop %v709
        %v711 = vmul.f32 %v704, 1.442695
        %v712 = vpow.pop %v711
        %v713 = vsel %vm371, %v706, 0.0
        %714 = vadd.xlane.f32.xlu0 %v713
        %v715 = vpop.xlane.xlu0 %714
        %v716 = vsel %vm371, %v708, 0.0
        %717 = vadd.xlane.f32.xlu0 %v716
        %v718 = vpop.xlane.xlu0 %717
        %v719 = vsel %vm371, %v710, 0.0
        %720 = vadd.xlane.f32.xlu0 %v719
        %v721 = vpop.xlane.xlu0 %720
        %v722 = vsel %vm371, %v712, 0.0
        %723 = vadd.xlane.f32.xlu0 %v722
        %v724 = vpop.xlane.xlu0 %723
        %v725 = vrcp.pop %v715
        %v726 = vrcp.pop %v718
        %v727 = vrcp.pop %v721
        %v728 = vrcp.pop %v724
        %v729 = vmul.f32 %v706, %v725
        %v730 = vmul.f32 %v708, %v726
        %v731 = vmul.f32 %v710, %v727
        %v732 = vmul.f32 %v712, %v728
        %733 = vrot.lane.b32.xlu0 %v352, 64
        %v734 = vpop.permute.xlu0 %733
        %v737 = vsel %vm371, %v729, 0
        %739 = vmatprep.subr.mxu0 0.0
        %740 = vmatpush1.msra.mxu0 0.0
        %741 = vmatprep.subr.mxu0 0.0
        %742 = vmatpush1.msra.mxu0 0.0
        %743 = vmatprep.subr.mxu0 0.0
        %744 = vmatpush1.msra.mxu0 0.0
        %745 = vmatprep.subr.mxu0 0.0
        %746 = vmatpush1.msra.mxu0 0.0
        %747 = vmatprep.subr.mxu0 0.0
        %748 = vmatpush1.msra.mxu0 0.0
        %749 = vmatprep.subr.mxu0 0.0
        %750 = vmatpush1.msra.mxu0 0.0
        %751 = vmatprep.subr.mxu0 0.0
        %752 = vmatpush1.msra.mxu0 0.0
        %753 = vmatprep.subr.mxu0 0.0
        %754 = vmatpush1.msra.mxu0 0.0
        %755 = vmatprep.subr.mxu0 0.0
        %756 = vmatpush1.msra.mxu0 0.0
        %757 = vmatprep.subr.mxu0 0.0
        %758 = vmatpush1.msra.mxu0 0.0
        %759 = vmatprep.subr.mxu0 0.0
        %760 = vmatpush1.msra.mxu0 0.0
        %761 = vmatprep.subr.mxu0 0.0
        %762 = vmatpush1.msra.mxu0 0.0
        %763 = vmatprep.subr.mxu0 0.0
        %764 = vmatpush1.msra.mxu0 0.0
        %765 = vmatprep.subr.mxu0 0.0
        %766 = vmatpush1.msra.mxu0 0.0
        %767 = vmatprep.subr.mxu0 0.0
        %768 = vmatpush1.msra.mxu0 0.0
        %769 = vmatprep.subr.mxu0 0.0
        %770 = vmatpush1.msra.mxu0 %v734
        %771 = vmatprep.subr.mxu0 0.0
        %772 = vmatpush2.msra.mxu0 0.0
        %773 = vmatprep.subr.mxu0 0.0
        %774 = vmatpush2.msra.mxu0 0.0
        %775 = vmatprep.subr.mxu0 0.0
        %776 = vmatpush2.msra.mxu0 0.0
        %777 = vmatprep.subr.mxu0 0.0
        %778 = vmatpush2.msra.mxu0 0.0
        %779 = vmatprep.subr.mxu0 0.0
        %780 = vmatpush2.msra.mxu0 0.0
        %781 = vmatprep.subr.mxu0 0.0
        %782 = vmatpush2.msra.mxu0 0.0
        %783 = vmatprep.subr.mxu0 0.0
        %784 = vmatpush2.msra.mxu0 0.0
        %785 = vmatprep.subr.mxu0 0.0
        %786 = vmatpush2.msra.mxu0 0.0
        %787 = vmatprep.subr.mxu0 0.0
        %788 = vmatpush2.msra.mxu0 0.0
        %789 = vmatprep.subr.mxu0 0.0
        %790 = vmatpush2.msra.mxu0 0.0
        %791 = vmatprep.subr.mxu0 0.0
        %792 = vmatpush2.msra.mxu0 0.0
        %793 = vmatprep.subr.mxu0 0.0
        %794 = vmatpush2.msra.mxu0 0.0
        %795 = vmatprep.subr.mxu0 0.0
        %796 = vmatpush2.msra.mxu0 0.0
        %797 = vmatprep.subr.mxu0 0.0
        %798 = vmatpush2.msra.mxu0 0.0
        %799 = vmatprep.subr.mxu0 0.0
        %800 = vmatpush2.msra.mxu0 0.0
        %801 = vmatprep.subr.mxu0 0.0
        %802 = vmatpush2.msra.mxu0 0.0
        %803 = vmatprep.mubr.f32.mxu0 0.0
        %804 = vmatmul.mubr.f32.gmra.mxu0 %v737
        %v805 = vpop.f32.mrf.mxu0
        %v806 = vadd.f32 0.0, %v805
        %v807 = vpop.f32.mrf.mxu0
        %808 = vdwg.mxu0
        %809 = vrot.lane.b32.xlu0 %v357, 64
        %v810 = vpop.permute.xlu0 %809
        %v813 = vsel %vm371, %v730, 0
        %815 = vmatprep.subr.mxu0 0.0
        %816 = vmatpush1.msra.mxu0 0.0
        %817 = vmatprep.subr.mxu0 0.0
        %818 = vmatpush1.msra.mxu0 0.0
        %819 = vmatprep.subr.mxu0 0.0
        %820 = vmatpush1.msra.mxu0 0.0
        %821 = vmatprep.subr.mxu0 0.0
        %822 = vmatpush1.msra.mxu0 0.0
        %823 = vmatprep.subr.mxu0 0.0
        %824 = vmatpush1.msra.mxu0 0.0
        %825 = vmatprep.subr.mxu0 0.0
        %826 = vmatpush1.msra.mxu0 0.0
        %827 = vmatprep.subr.mxu0 0.0
        %828 = vmatpush1.msra.mxu0 0.0
        %829 = vmatprep.subr.mxu0 0.0
        %830 = vmatpush1.msra.mxu0 0.0
        %831 = vmatprep.subr.mxu0 0.0
        %832 = vmatpush1.msra.mxu0 0.0
        %833 = vmatprep.subr.mxu0 0.0
        %834 = vmatpush1.msra.mxu0 0.0
        %835 = vmatprep.subr.mxu0 0.0
        %836 = vmatpush1.msra.mxu0 0.0
        %837 = vmatprep.subr.mxu0 0.0
        %838 = vmatpush1.msra.mxu0 0.0
        %839 = vmatprep.subr.mxu0 0.0
        %840 = vmatpush1.msra.mxu0 0.0
        %841 = vmatprep.subr.mxu0 0.0
        %842 = vmatpush1.msra.mxu0 0.0
        %843 = vmatprep.subr.mxu0 0.0
        %844 = vmatpush1.msra.mxu0 0.0
        %845 = vmatprep.subr.mxu0 0.0
        %846 = vmatpush1.msra.mxu0 %v810
        %847 = vmatprep.subr.mxu0 0.0
        %848 = vmatpush2.msra.mxu0 0.0
        %849 = vmatprep.subr.mxu0 0.0
        %850 = vmatpush2.msra.mxu0 0.0
        %851 = vmatprep.subr.mxu0 0.0
        %852 = vmatpush2.msra.mxu0 0.0
        %853 = vmatprep.subr.mxu0 0.0
        %854 = vmatpush2.msra.mxu0 0.0
        %855 = vmatprep.subr.mxu0 0.0
        %856 = vmatpush2.msra.mxu0 0.0
        %857 = vmatprep.subr.mxu0 0.0
        %858 = vmatpush2.msra.mxu0 0.0
        %859 = vmatprep.subr.mxu0 0.0
        %860 = vmatpush2.msra.mxu0 0.0
        %861 = vmatprep.subr.mxu0 0.0
        %862 = vmatpush2.msra.mxu0 0.0
        %863 = vmatprep.subr.mxu0 0.0
        %864 = vmatpush2.msra.mxu0 0.0
        %865 = vmatprep.subr.mxu0 0.0
        %866 = vmatpush2.msra.mxu0 0.0
        %867 = vmatprep.subr.mxu0 0.0
        %868 = vmatpush2.msra.mxu0 0.0
        %869 = vmatprep.subr.mxu0 0.0
        %870 = vmatpush2.msra.mxu0 0.0
        %871 = vmatprep.subr.mxu0 0.0
        %872 = vmatpush2.msra.mxu0 0.0
        %873 = vmatprep.subr.mxu0 0.0
        %874 = vmatpush2.msra.mxu0 0.0
        %875 = vmatprep.subr.mxu0 0.0
        %876 = vmatpush2.msra.mxu0 0.0
        %877 = vmatprep.subr.mxu0 0.0
        %878 = vmatpush2.msra.mxu0 0.0
        %879 = vmatprep.mubr.f32.mxu0 0.0
        %880 = vmatmul.mubr.f32.gmra.mxu0 %v813
        %v881 = vpop.f32.mrf.mxu0
        %v882 = vadd.f32 0.0, %v881
        %v883 = vpop.f32.mrf.mxu0
        %884 = vdwg.mxu0
        %885 = vrot.lane.b32.xlu0 %v360, 64
        %v886 = vpop.permute.xlu0 %885
        %v889 = vsel %vm371, %v731, 0
        %891 = vmatprep.subr.mxu0 0.0
        %892 = vmatpush1.msra.mxu0 0.0
        %893 = vmatprep.subr.mxu0 0.0
        %894 = vmatpush1.msra.mxu0 0.0
        %895 = vmatprep.subr.mxu0 0.0
        %896 = vmatpush1.msra.mxu0 0.0
        %897 = vmatprep.subr.mxu0 0.0
        %898 = vmatpush1.msra.mxu0 0.0
        %899 = vmatprep.subr.mxu0 0.0
        %900 = vmatpush1.msra.mxu0 0.0
        %901 = vmatprep.subr.mxu0 0.0
        %902 = vmatpush1.msra.mxu0 0.0
        %903 = vmatprep.subr.mxu0 0.0
        %904 = vmatpush1.msra.mxu0 0.0
        %905 = vmatprep.subr.mxu0 0.0
        %906 = vmatpush1.msra.mxu0 0.0
        %907 = vmatprep.subr.mxu0 0.0
        %908 = vmatpush1.msra.mxu0 0.0
        %909 = vmatprep.subr.mxu0 0.0
        %910 = vmatpush1.msra.mxu0 0.0
        %911 = vmatprep.subr.mxu0 0.0
        %912 = vmatpush1.msra.mxu0 0.0
        %913 = vmatprep.subr.mxu0 0.0
        %914 = vmatpush1.msra.mxu0 0.0
        %915 = vmatprep.subr.mxu0 0.0
        %916 = vmatpush1.msra.mxu0 0.0
        %917 = vmatprep.subr.mxu0 0.0
        %918 = vmatpush1.msra.mxu0 0.0
        %919 = vmatprep.subr.mxu0 0.0
        %920 = vmatpush1.msra.mxu0 0.0
        %921 = vmatprep.subr.mxu0 0.0
        %922 = vmatpush1.msra.mxu0 %v886
        %923 = vmatprep.subr.mxu0 0.0
        %924 = vmatpush2.msra.mxu0 0.0
        %925 = vmatprep.subr.mxu0 0.0
        %926 = vmatpush2.msra.mxu0 0.0
        %927 = vmatprep.subr.mxu0 0.0
        %928 = vmatpush2.msra.mxu0 0.0
        %929 = vmatprep.subr.mxu0 0.0
        %930 = vmatpush2.msra.mxu0 0.0
        %931 = vmatprep.subr.mxu0 0.0
        %932 = vmatpush2.msra.mxu0 0.0
        %933 = vmatprep.subr.mxu0 0.0
        %934 = vmatpush2.msra.mxu0 0.0
        %935 = vmatprep.subr.mxu0 0.0
        %936 = vmatpush2.msra.mxu0 0.0
        %937 = vmatprep.subr.mxu0 0.0
        %938 = vmatpush2.msra.mxu0 0.0
        %939 = vmatprep.subr.mxu0 0.0
        %940 = vmatpush2.msra.mxu0 0.0
        %941 = vmatprep.subr.mxu0 0.0
        %942 = vmatpush2.msra.mxu0 0.0
        %943 = vmatprep.subr.mxu0 0.0
        %944 = vmatpush2.msra.mxu0 0.0
        %945 = vmatprep.subr.mxu0 0.0
        %946 = vmatpush2.msra.mxu0 0.0
        %947 = vmatprep.subr.mxu0 0.0
        %948 = vmatpush2.msra.mxu0 0.0
        %949 = vmatprep.subr.mxu0 0.0
        %950 = vmatpush2.msra.mxu0 0.0
        %951 = vmatprep.subr.mxu0 0.0
        %952 = vmatpush2.msra.mxu0 0.0
        %953 = vmatprep.subr.mxu0 0.0
        %954 = vmatpush2.msra.mxu0 0.0
        %955 = vmatprep.mubr.f32.mxu0 0.0
        %956 = vmatmul.mubr.f32.gmra.mxu0 %v889
        %v957 = vpop.f32.mrf.mxu0
        %v958 = vadd.f32 0.0, %v957
        %v959 = vpop.f32.mrf.mxu0
        %960 = vdwg.mxu0
        %961 = vrot.lane.b32.xlu0 %v363, 64
        %v962 = vpop.permute.xlu0 %961
        %v965 = vsel %vm371, %v732, 0
        %967 = vmatprep.subr.mxu0 0.0
        %968 = vmatpush1.msra.mxu0 0.0
        %969 = vmatprep.subr.mxu0 0.0
        %970 = vmatpush1.msra.mxu0 0.0
        %971 = vmatprep.subr.mxu0 0.0
        %972 = vmatpush1.msra.mxu0 0.0
        %973 = vmatprep.subr.mxu0 0.0
        %974 = vmatpush1.msra.mxu0 0.0
        %975 = vmatprep.subr.mxu0 0.0
        %976 = vmatpush1.msra.mxu0 0.0
        %977 = vmatprep.subr.mxu0 0.0
        %978 = vmatpush1.msra.mxu0 0.0
        %979 = vmatprep.subr.mxu0 0.0
        %980 = vmatpush1.msra.mxu0 0.0
        %981 = vmatprep.subr.mxu0 0.0
        %982 = vmatpush1.msra.mxu0 0.0
        %983 = vmatprep.subr.mxu0 0.0
        %984 = vmatpush1.msra.mxu0 0.0
        %985 = vmatprep.subr.mxu0 0.0
        %986 = vmatpush1.msra.mxu0 0.0
        %987 = vmatprep.subr.mxu0 0.0
        %988 = vmatpush1.msra.mxu0 0.0
        %989 = vmatprep.subr.mxu0 0.0
        %990 = vmatpush1.msra.mxu0 0.0
        %991 = vmatprep.subr.mxu0 0.0
        %992 = vmatpush1.msra.mxu0 0.0
        %993 = vmatprep.subr.mxu0 0.0
        %994 = vmatpush1.msra.mxu0 0.0
        %995 = vmatprep.subr.mxu0 0.0
        %996 = vmatpush1.msra.mxu0 0.0
        %997 = vmatprep.subr.mxu0 0.0
        %998 = vmatpush1.msra.mxu0 %v962
        %999 = vmatprep.subr.mxu0 0.0
        %1000 = vmatpush2.msra.mxu0 0.0
        %1001 = vmatprep.subr.mxu0 0.0
        %1002 = vmatpush2.msra.mxu0 0.0
        %1003 = vmatprep.subr.mxu0 0.0
        %1004 = vmatpush2.msra.mxu0 0.0
        %1005 = vmatprep.subr.mxu0 0.0
        %1006 = vmatpush2.msra.mxu0 0.0
        %1007 = vmatprep.subr.mxu0 0.0
        %1008 = vmatpush2.msra.mxu0 0.0
        %1009 = vmatprep.subr.mxu0 0.0
        %1010 = vmatpush2.msra.mxu0 0.0
        %1011 = vmatprep.subr.mxu0 0.0
        %1012 = vmatpush2.msra.mxu0 0.0
        %1013 = vmatprep.subr.mxu0 0.0
        %1014 = vmatpush2.msra.mxu0 0.0
        %1015 = vmatprep.subr.mxu0 0.0
        %1016 = vmatpush2.msra.mxu0 0.0
        %1017 = vmatprep.subr.mxu0 0.0
        %1018 = vmatpush2.msra.mxu0 0.0
        %1019 = vmatprep.subr.mxu0 0.0
        %1020 = vmatpush2.msra.mxu0 0.0
        %1021 = vmatprep.subr.mxu0 0.0
        %1022 = vmatpush2.msra.mxu0 0.0
        %1023 = vmatprep.subr.mxu0 0.0
        %1024 = vmatpush2.msra.mxu0 0.0
        %1025 = vmatprep.subr.mxu0 0.0
        %1026 = vmatpush2.msra.mxu0 0.0
        %1027 = vmatprep.subr.mxu0 0.0
        %1028 = vmatpush2.msra.mxu0 0.0
        %1029 = vmatprep.subr.mxu0 0.0
        %1030 = vmatpush2.msra.mxu0 0.0
        %1031 = vmatprep.mubr.f32.mxu0 0.0
        %1032 = vmatmul.mubr.f32.gmra.mxu0 %v965
        %v1033 = vpop.f32.mrf.mxu0
        %v1034 = vadd.f32 0.0, %v1033
        %v1035 = vpop.f32.mrf.mxu0
        %1036 = vdwg.mxu0
        %v1037 = vld [vmem:[#allocation7] sm:$0xff]
        %v1038 = vld [vmem:[#allocation7 + $0x8] sm:$0xff]
        %v1039 = vld [vmem:[#allocation7 + $0x10] sm:$0xff]
        %v1040 = vld [vmem:[#allocation7 + $0x18] sm:$0xff]
        %v1042 = vsel %vm371, %v806, 0
        %1044 = vmatprep.subr.mxu0 0.0
        %1045 = vmatpush1.msra.mxu0 0.0
        %1046 = vmatprep.subr.mxu0 0.0
        %1047 = vmatpush1.msra.mxu0 0.0
        %1048 = vmatprep.subr.mxu0 0.0
        %1049 = vmatpush1.msra.mxu0 0.0
        %1050 = vmatprep.subr.mxu0 0.0
        %1051 = vmatpush1.msra.mxu0 0.0
        %1052 = vmatprep.subr.mxu0 0.0
        %1053 = vmatpush1.msra.mxu0 0.0
        %1054 = vmatprep.subr.mxu0 0.0
        %1055 = vmatpush1.msra.mxu0 0.0
        %1056 = vmatprep.subr.mxu0 0.0
        %1057 = vmatpush1.msra.mxu0 0.0
        %1058 = vmatprep.subr.mxu0 0.0
        %1059 = vmatpush1.msra.mxu0 0.0
        %1060 = vmatprep.subr.mxu0 0.0
        %1061 = vmatpush1.msra.mxu0 0.0
        %1062 = vmatprep.subr.mxu0 0.0
        %1063 = vmatpush1.msra.mxu0 0.0
        %1064 = vmatprep.subr.mxu0 0.0
        %1065 = vmatpush1.msra.mxu0 0.0
        %1066 = vmatprep.subr.mxu0 0.0
        %1067 = vmatpush1.msra.mxu0 0.0
        %1068 = vmatprep.subr.mxu0 0.0
        %1069 = vmatpush1.msra.mxu0 0.0
        %1070 = vmatprep.subr.mxu0 0.0
        %1071 = vmatpush1.msra.mxu0 0.0
        %1072 = vmatprep.subr.mxu0 0.0
        %1073 = vmatpush1.msra.mxu0 0.0
        %1074 = vmatprep.subr.mxu0 0.0
        %1075 = vmatpush1.msra.mxu0 %v1037
        %1076 = vmatprep.subr.mxu0 0.0
        %1077 = vmatpush2.msra.mxu0 0.0
        %1078 = vmatprep.subr.mxu0 0.0
        %1079 = vmatpush2.msra.mxu0 0.0
        %1080 = vmatprep.subr.mxu0 0.0
        %1081 = vmatpush2.msra.mxu0 0.0
        %1082 = vmatprep.subr.mxu0 0.0
        %1083 = vmatpush2.msra.mxu0 0.0
        %1084 = vmatprep.subr.mxu0 0.0
        %1085 = vmatpush2.msra.mxu0 0.0
        %1086 = vmatprep.subr.mxu0 0.0
        %1087 = vmatpush2.msra.mxu0 0.0
        %1088 = vmatprep.subr.mxu0 0.0
        %1089 = vmatpush2.msra.mxu0 0.0
        %1090 = vmatprep.subr.mxu0 0.0
        %1091 = vmatpush2.msra.mxu0 0.0
        %1092 = vmatprep.subr.mxu0 0.0
        %1093 = vmatpush2.msra.mxu0 0.0
        %1094 = vmatprep.subr.mxu0 0.0
        %1095 = vmatpush2.msra.mxu0 0.0
        %1096 = vmatprep.subr.mxu0 0.0
        %1097 = vmatpush2.msra.mxu0 0.0
        %1098 = vmatprep.subr.mxu0 0.0
        %1099 = vmatpush2.msra.mxu0 0.0
        %1100 = vmatprep.subr.mxu0 0.0
        %1101 = vmatpush2.msra.mxu0 0.0
        %1102 = vmatprep.subr.mxu0 0.0
        %1103 = vmatpush2.msra.mxu0 0.0
        %1104 = vmatprep.subr.mxu0 0.0
        %1105 = vmatpush2.msra.mxu0 0.0
        %1106 = vmatprep.subr.mxu0 0.0
        %1107 = vmatpush2.msra.mxu0 0.0
        %1108 = vmatprep.mubr.f32.mxu0 0.0
        %1109 = vmatmul.mubr.f32.gmra.mxu0 %v1042
        %v1110 = vpop.f32.mrf.mxu0
        %v1111 = vadd.f32 0.0, %v1110
        %v1112 = vpop.f32.mrf.mxu0
        %1113 = vdwg.mxu0
        %v1115 = vsel %vm371, %v882, 0
        %1117 = vmatprep.subr.mxu0 0.0
        %1118 = vmatpush1.msra.mxu0 0.0
        %1119 = vmatprep.subr.mxu0 0.0
        %1120 = vmatpush1.msra.mxu0 0.0
        %1121 = vmatprep.subr.mxu0 0.0
        %1122 = vmatpush1.msra.mxu0 0.0
        %1123 = vmatprep.subr.mxu0 0.0
        %1124 = vmatpush1.msra.mxu0 0.0
        %1125 = vmatprep.subr.mxu0 0.0
        %1126 = vmatpush1.msra.mxu0 0.0
        %1127 = vmatprep.subr.mxu0 0.0
        %1128 = vmatpush1.msra.mxu0 0.0
        %1129 = vmatprep.subr.mxu0 0.0
        %1130 = vmatpush1.msra.mxu0 0.0
        %1131 = vmatprep.subr.mxu0 0.0
        %1132 = vmatpush1.msra.mxu0 0.0
        %1133 = vmatprep.subr.mxu0 0.0
        %1134 = vmatpush1.msra.mxu0 0.0
        %1135 = vmatprep.subr.mxu0 0.0
        %1136 = vmatpush1.msra.mxu0 0.0
        %1137 = vmatprep.subr.mxu0 0.0
        %1138 = vmatpush1.msra.mxu0 0.0
        %1139 = vmatprep.subr.mxu0 0.0
        %1140 = vmatpush1.msra.mxu0 0.0
        %1141 = vmatprep.subr.mxu0 0.0
        %1142 = vmatpush1.msra.mxu0 0.0
        %1143 = vmatprep.subr.mxu0 0.0
        %1144 = vmatpush1.msra.mxu0 0.0
        %1145 = vmatprep.subr.mxu0 0.0
        %1146 = vmatpush1.msra.mxu0 0.0
        %1147 = vmatprep.subr.mxu0 0.0
        %1148 = vmatpush1.msra.mxu0 %v1038
        %1149 = vmatprep.subr.mxu0 0.0
        %1150 = vmatpush2.msra.mxu0 0.0
        %1151 = vmatprep.subr.mxu0 0.0
        %1152 = vmatpush2.msra.mxu0 0.0
        %1153 = vmatprep.subr.mxu0 0.0
        %1154 = vmatpush2.msra.mxu0 0.0
        %1155 = vmatprep.subr.mxu0 0.0
        %1156 = vmatpush2.msra.mxu0 0.0
        %1157 = vmatprep.subr.mxu0 0.0
        %1158 = vmatpush2.msra.mxu0 0.0
        %1159 = vmatprep.subr.mxu0 0.0
        %1160 = vmatpush2.msra.mxu0 0.0
        %1161 = vmatprep.subr.mxu0 0.0
        %1162 = vmatpush2.msra.mxu0 0.0
        %1163 = vmatprep.subr.mxu0 0.0
        %1164 = vmatpush2.msra.mxu0 0.0
        %1165 = vmatprep.subr.mxu0 0.0
        %1166 = vmatpush2.msra.mxu0 0.0
        %1167 = vmatprep.subr.mxu0 0.0
        %1168 = vmatpush2.msra.mxu0 0.0
        %1169 = vmatprep.subr.mxu0 0.0
        %1170 = vmatpush2.msra.mxu0 0.0
        %1171 = vmatprep.subr.mxu0 0.0
        %1172 = vmatpush2.msra.mxu0 0.0
        %1173 = vmatprep.subr.mxu0 0.0
        %1174 = vmatpush2.msra.mxu0 0.0
        %1175 = vmatprep.subr.mxu0 0.0
        %1176 = vmatpush2.msra.mxu0 0.0
        %1177 = vmatprep.subr.mxu0 0.0
        %1178 = vmatpush2.msra.mxu0 0.0
        %1179 = vmatprep.subr.mxu0 0.0
        %1180 = vmatpush2.msra.mxu0 0.0
        %1181 = vmatprep.mubr.f32.mxu0 0.0
        %1182 = vmatmul.mubr.f32.gmra.mxu0 %v1115
        %v1183 = vpop.f32.mrf.mxu0
        %v1184 = vadd.f32 0.0, %v1183
        %v1185 = vpop.f32.mrf.mxu0
        %1186 = vdwg.mxu0
        %v1188 = vsel %vm371, %v958, 0
        %1190 = vmatprep.subr.mxu0 0.0
        %1191 = vmatpush1.msra.mxu0 0.0
        %1192 = vmatprep.subr.mxu0 0.0
        %1193 = vmatpush1.msra.mxu0 0.0
        %1194 = vmatprep.subr.mxu0 0.0
        %1195 = vmatpush1.msra.mxu0 0.0
        %1196 = vmatprep.subr.mxu0 0.0
        %1197 = vmatpush1.msra.mxu0 0.0
        %1198 = vmatprep.subr.mxu0 0.0
        %1199 = vmatpush1.msra.mxu0 0.0
        %1200 = vmatprep.subr.mxu0 0.0
        %1201 = vmatpush1.msra.mxu0 0.0
        %1202 = vmatprep.subr.mxu0 0.0
        %1203 = vmatpush1.msra.mxu0 0.0
        %1204 = vmatprep.subr.mxu0 0.0
        %1205 = vmatpush1.msra.mxu0 0.0
        %1206 = vmatprep.subr.mxu0 0.0
        %1207 = vmatpush1.msra.mxu0 0.0
        %1208 = vmatprep.subr.mxu0 0.0
        %1209 = vmatpush1.msra.mxu0 0.0
        %1210 = vmatprep.subr.mxu0 0.0
        %1211 = vmatpush1.msra.mxu0 0.0
        %1212 = vmatprep.subr.mxu0 0.0
        %1213 = vmatpush1.msra.mxu0 0.0
        %1214 = vmatprep.subr.mxu0 0.0
        %1215 = vmatpush1.msra.mxu0 0.0
        %1216 = vmatprep.subr.mxu0 0.0
        %1217 = vmatpush1.msra.mxu0 0.0
        %1218 = vmatprep.subr.mxu0 0.0
        %1219 = vmatpush1.msra.mxu0 0.0
        %1220 = vmatprep.subr.mxu0 0.0
        %1221 = vmatpush1.msra.mxu0 %v1039
        %1222 = vmatprep.subr.mxu0 0.0
        %1223 = vmatpush2.msra.mxu0 0.0
        %1224 = vmatprep.subr.mxu0 0.0
        %1225 = vmatpush2.msra.mxu0 0.0
        %1226 = vmatprep.subr.mxu0 0.0
        %1227 = vmatpush2.msra.mxu0 0.0
        %1228 = vmatprep.subr.mxu0 0.0
        %1229 = vmatpush2.msra.mxu0 0.0
        %1230 = vmatprep.subr.mxu0 0.0
        %1231 = vmatpush2.msra.mxu0 0.0
        %1232 = vmatprep.subr.mxu0 0.0
        %1233 = vmatpush2.msra.mxu0 0.0
        %1234 = vmatprep.subr.mxu0 0.0
        %1235 = vmatpush2.msra.mxu0 0.0
        %1236 = vmatprep.subr.mxu0 0.0
        %1237 = vmatpush2.msra.mxu0 0.0
        %1238 = vmatprep.subr.mxu0 0.0
        %1239 = vmatpush2.msra.mxu0 0.0
        %1240 = vmatprep.subr.mxu0 0.0
        %1241 = vmatpush2.msra.mxu0 0.0
        %1242 = vmatprep.subr.mxu0 0.0
        %1243 = vmatpush2.msra.mxu0 0.0
        %1244 = vmatprep.subr.mxu0 0.0
        %1245 = vmatpush2.msra.mxu0 0.0
        %1246 = vmatprep.subr.mxu0 0.0
        %1247 = vmatpush2.msra.mxu0 0.0
        %1248 = vmatprep.subr.mxu0 0.0
        %1249 = vmatpush2.msra.mxu0 0.0
        %1250 = vmatprep.subr.mxu0 0.0
        %1251 = vmatpush2.msra.mxu0 0.0
        %1252 = vmatprep.subr.mxu0 0.0
        %1253 = vmatpush2.msra.mxu0 0.0
        %1254 = vmatprep.mubr.f32.mxu0 0.0
        %1255 = vmatmul.mubr.f32.gmra.mxu0 %v1188
        %v1256 = vpop.f32.mrf.mxu0
        %v1257 = vadd.f32 0.0, %v1256
        %v1258 = vpop.f32.mrf.mxu0
        %1259 = vdwg.mxu0
        %v1261 = vsel %vm371, %v1034, 0
        %1263 = vmatprep.subr.mxu0 0.0
        %1264 = vmatpush1.msra.mxu0 0.0
        %1265 = vmatprep.subr.mxu0 0.0
        %1266 = vmatpush1.msra.mxu0 0.0
        %1267 = vmatprep.subr.mxu0 0.0
        %1268 = vmatpush1.msra.mxu0 0.0
        %1269 = vmatprep.subr.mxu0 0.0
        %1270 = vmatpush1.msra.mxu0 0.0
        %1271 = vmatprep.subr.mxu0 0.0
        %1272 = vmatpush1.msra.mxu0 0.0
        %1273 = vmatprep.subr.mxu0 0.0
        %1274 = vmatpush1.msra.mxu0 0.0
        %1275 = vmatprep.subr.mxu0 0.0
        %1276 = vmatpush1.msra.mxu0 0.0
        %1277 = vmatprep.subr.mxu0 0.0
        %1278 = vmatpush1.msra.mxu0 0.0
        %1279 = vmatprep.subr.mxu0 0.0
        %1280 = vmatpush1.msra.mxu0 0.0
        %1281 = vmatprep.subr.mxu0 0.0
        %1282 = vmatpush1.msra.mxu0 0.0
        %1283 = vmatprep.subr.mxu0 0.0
        %1284 = vmatpush1.msra.mxu0 0.0
        %1285 = vmatprep.subr.mxu0 0.0
        %1286 = vmatpush1.msra.mxu0 0.0
        %1287 = vmatprep.subr.mxu0 0.0
        %1288 = vmatpush1.msra.mxu0 0.0
        %1289 = vmatprep.subr.mxu0 0.0
        %1290 = vmatpush1.msra.mxu0 0.0
        %1291 = vmatprep.subr.mxu0 0.0
        %1292 = vmatpush1.msra.mxu0 0.0
        %1293 = vmatprep.subr.mxu0 0.0
        %1294 = vmatpush1.msra.mxu0 %v1040
        %1295 = vmatprep.subr.mxu0 0.0
        %1296 = vmatpush2.msra.mxu0 0.0
        %1297 = vmatprep.subr.mxu0 0.0
        %1298 = vmatpush2.msra.mxu0 0.0
        %1299 = vmatprep.subr.mxu0 0.0
        %1300 = vmatpush2.msra.mxu0 0.0
        %1301 = vmatprep.subr.mxu0 0.0
        %1302 = vmatpush2.msra.mxu0 0.0
        %1303 = vmatprep.subr.mxu0 0.0
        %1304 = vmatpush2.msra.mxu0 0.0
        %1305 = vmatprep.subr.mxu0 0.0
        %1306 = vmatpush2.msra.mxu0 0.0
        %1307 = vmatprep.subr.mxu0 0.0
        %1308 = vmatpush2.msra.mxu0 0.0
        %1309 = vmatprep.subr.mxu0 0.0
        %1310 = vmatpush2.msra.mxu0 0.0
        %1311 = vmatprep.subr.mxu0 0.0
        %1312 = vmatpush2.msra.mxu0 0.0
        %1313 = vmatprep.subr.mxu0 0.0
        %1314 = vmatpush2.msra.mxu0 0.0
        %1315 = vmatprep.subr.mxu0 0.0
        %1316 = vmatpush2.msra.mxu0 0.0
        %1317 = vmatprep.subr.mxu0 0.0
        %1318 = vmatpush2.msra.mxu0 0.0
        %1319 = vmatprep.subr.mxu0 0.0
        %1320 = vmatpush2.msra.mxu0 0.0
        %1321 = vmatprep.subr.mxu0 0.0
        %1322 = vmatpush2.msra.mxu0 0.0
        %1323 = vmatprep.subr.mxu0 0.0
        %1324 = vmatpush2.msra.mxu0 0.0
        %1325 = vmatprep.subr.mxu0 0.0
        %1326 = vmatpush2.msra.mxu0 0.0
        %1327 = vmatprep.mubr.f32.mxu0 0.0
        %1328 = vmatmul.mubr.f32.gmra.mxu0 %v1261
        %v1329 = vpop.f32.mrf.mxu0
        %v1330 = vadd.f32 0.0, %v1329
        %v1331 = vpop.f32.mrf.mxu0
        %1332 = vdwg.mxu0
        %v1333 = vsel %vm281, %v1111, 0.0
        %v1334 = vsel %vm281, %v1184, 0.0
        %v1335 = vadd.f32 %v1333, %v1334
        %v1336 = vsel %vm281, %v1257, 0.0
        %v1337 = vadd.f32 %v1335, %v1336
        %v1338 = vsel %vm281, %v1330, 0.0
        %v1339 = vadd.f32 %v1337, %v1338
        %v1340 = vld [vmem:[%s4] sm:$0x1]
        %v1342 = vlaneseq
        %v1343 = vshrl.u32 %v1342, 7
        %v1344 = vsub.s32 0, %v1343
        %v1345 = vrot.slane %v1340, %v1344
        %v1347 = vadd.f32 %v1339, %v1345
        %1348 = vst.msk [vmem:[%s268] sm:$0xff] %vm281, %v1347
        %s1349 = sand.u32 %s141, 1
        %s1350 = scalar_lea.sflag [#allocation4], %s1349
        %s1351 = sand.u32 %s141, 1
        %s1352 = smul.addr %s1351, 8
        %s1353 = scalar_lea.vmem [#allocation8], %s1352
        // Predicated region
        $region53: #{tpu_custom_call.1} parent=39 // pred_check
          %p1354 = pneg %p151
        $region54: #{tpu_custom_call.1} parent=39 // pred_check_branch
          %1356 = sbr.rel (%p1354) target = $region56
        $region55: #{tpu_custom_call.1} parent=39 // pred_region
          %s1358 = ssub.s32 128, 128
          %1359 = vsyncadd %s1350, %s1358
          %s1360 = smul.addr %s23, 128
          %s1361 = scalar_lea.hbm %s5, %s1360
          %s1363 = sshll.u32 %s1353, 4
          %s1364 = int_to_ptr.vmem [resolvable:$true] %s1363
          %1366 = dma.vmem_to_hbm [thread:$0]  %s1364, 128, %s1361, %s1350
        $region56: #{tpu_custom_call.1} parent=39 // pred_fallthru
          _
      $region40: #{tpu_custom_call.1} parent=5 // pred_fallthru
        _
      %p1367 = scmp.le.s32.totalorder 2, %s18
      // Predicated region
      $region57: #{tpu_custom_call.1} parent=5 // pred_check
        %p1368 = pneg %p1367
      $region58: #{tpu_custom_call.1} parent=5 // pred_check_branch
        %1370 = sbr.rel (%p1368) target = $region60
      $region59: #{tpu_custom_call.1} parent=5 // pred_region
        %s1371 = ssub.s32 %s18, 2
        // Predicated region
        $region61: #{tpu_custom_call.1} parent=59 // pred_check
          %p1372 = pneg %p157
        $region62: #{tpu_custom_call.1} parent=59 // pred_check_branch
          %1374 = sbr.rel (%p1372) target = $region64
        $region63: #{tpu_custom_call.1} parent=59 // pred_region
          %s1375 = sand.u32 %s142, 1
          %s1376 = scalar_lea.sflag [#allocation4], %s1375
          %s1377 = sand.u32 %s142, 1
          %s1378 = smul.addr %s1377, 8
          %s1379 = scalar_lea.vmem [#allocation8], %s1378
          %1380 = dma.done %s1376, 128
        $region64: #{tpu_custom_call.1} parent=59 // pred_fallthru
          _
      $region60: #{tpu_custom_call.1} parent=5 // pred_fallthru
        _
    $region6: #{tpu_custom_call.1} parent=1 // loop_footer
      %s22 = sadd.s32 1, %s18
    $region7: #{tpu_custom_call.1} parent=1 // loop_footer_branch
      %17 = sbr.rel target = $region3
    $region8: #{tpu_custom_call.1} parent=1 // loop_exit
      _
    %1381 = vsyncpa [#allocation3], 1
    %s1382 = scalar_lea.sflag [#allocation3], 1
    %1383 = vsyncpa %s1382, 1
    %1384 = vsyncpa [#allocation6], 1
    %1385 = vsyncpa [#allocation4], 1
    %s1386 = scalar_lea.sflag [#allocation4], 1
    %1387 = vsyncpa %s1386, 1

</llo_original>
